<compile_context>
chip_gen: v7x
topology: tpu7x:2x2x1
jax: 0.10.0
libtpu: 0.0.40
codegen_flags: <defaults>
</compile_context>

<pallas_src>
import functools

import jax
import jax.numpy as jnp
from jax.experimental import pallas as pl
from jax.experimental.pallas import tpu as pltpu

_BN_EPS = 1e-5


def _vmem_limit_bytes():
    """Generation-aware scoped VMEM limit with headroom (v5e/v6e: ~96 MiB of
    128 MiB physical; v7x: ~48 MiB of 64 MiB physical)."""
    try:
        cap = int(pltpu.get_tpu_info().vmem_capacity_bytes)
    except Exception:  # interpret mode / query unavailable -> safe default
        return 32 * 1024 * 1024
    return int(max(32 << 20, min(cap - (16 << 20), 96 << 20)))


def _conv_bn_stats_kernel(xpad_ref, w_ref, y_ref, stats_ref, *,
                          Ho, Wo, KH, KW, stride, dilation):
    """One batch element, channel-major:
        y[cout, ho*wo]   = sum_k  w[cout, k] * im2col(x)[k, ho*wo]   (bf16 MXU, f32 acc)
        stats[cout, 0/1] = per-batch channel sum / sum-of-squares (BN partials).
    """
    x = xpad_ref[0]                                        # (Cin, Hp, Wp), bf16, zero-padded
    cols = []
    for kh in range(KH):
        for kw in range(KW):
            r0, c0 = kh * dilation, kw * dilation
            r1 = r0 + (Ho - 1) * stride + 1
            c1 = c0 + (Wo - 1) * stride + 1
            patch = x[:, r0:r1:stride, c0:c1:stride]       # (Cin, Ho, Wo)
            # Fold spatial into the lane dim; concat is along the leading axis
            # so the K2 rows stack on sublanes (lane width stays Ho*Wo).
            cols.append(patch.reshape(-1, Ho * Wo))        # (Cin, Ho*Wo)
    patches = jnp.concatenate(cols, axis=0)                # (K2, Ho*Wo), row order (kh, kw, cin)

    # Single MXU matmul, lane-dense (Ho*Wo >= 128) output, f32 accumulation.
    acc = jnp.dot(w_ref[...], patches,
                  preferred_element_type=jnp.float32)      # (Cout, Ho*Wo) f32
    y_ref[0] = acc

    # Per-batch BN partials (finalized in the wrapper so the training-mode
    # batch statistics stay exact even though the grid tiles over N).
    s = jnp.sum(acc, axis=1, keepdims=True)                # (Cout, 1)
    ss = jnp.sum(acc * acc, axis=1, keepdims=True)         # (Cout, 1)
    stats_ref[0] = jnp.concatenate([s, ss], axis=1)        # (Cout, 2)


def basic_conv2d1_forward(x_nchw, params, *, stride=1, padding=0, dilation=1,
                          matmul_dtype=jnp.bfloat16):
    """Conv2d(bias=False) -> BatchNorm2d (training-mode stats). NCHW in / NCHW out."""
    w = params["weight"]                                   # (Cout, Cin, KH, KW)
    gamma, beta = params["gamma"], params["beta"]          # (Cout,)
    N, Cin, H, W = x_nchw.shape
    Cout, Cin_w, KH, KW = w.shape
    assert Cin == Cin_w

    Ho = (H + 2 * padding - dilation * (KH - 1) - 1) // stride + 1
    Wo = (W + 2 * padding - dilation * (KW - 1) - 1) // stride + 1
    K2 = KH * KW * Cin
    Hp, Wp = H + 2 * padding, W + 2 * padding

    # Spatial zero-padding + single wrapper-side cast to the MXU dtype
    # (no in-kernel pad scratch, no per-step VPU cast, half the input DMA).
    xpad = jnp.pad(x_nchw, ((0, 0), (0, 0),
                            (padding, padding), (padding, padding))
                   ).astype(matmul_dtype)                  # (N, Cin, Hp, Wp)

    # PyTorch (Cout, Cin, KH, KW) -> (Cout, K2) with K2 ordered (kh, kw, cin)
    # to match the in-kernel patch stacking.
    w_mat = jnp.transpose(w, (0, 2, 3, 1)).reshape(Cout, K2).astype(matmul_dtype)

    conv_kernel = functools.partial(
        _conv_bn_stats_kernel, Ho=Ho, Wo=Wo, KH=KH, KW=KW,
        stride=stride, dilation=dilation)

    vmem_limit = _vmem_limit_bytes()
    y, stats = pl.pallas_call(
        conv_kernel,
        grid=(N,),
        in_specs=[
            pl.BlockSpec((1, Cin, Hp, Wp), lambda n: (n, 0, 0, 0)),
            pl.BlockSpec((Cout, K2), lambda n: (0, 0)),
        ],
        out_specs=(
            pl.BlockSpec((1, Cout, Ho * Wo), lambda n: (n, 0, 0)),
            pl.BlockSpec((1, Cout, 2), lambda n: (n, 0, 0)),
        ),
        out_shape=(
            jax.ShapeDtypeStruct((N, Cout, Ho * Wo), jnp.float32),
            jax.ShapeDtypeStruct((N, Cout, 2), jnp.float32),
        ),
        compiler_params=pltpu.CompilerParams(
            dimension_semantics=("parallel",),   # v7x: shard batch over 2 TCs
            vmem_limit_bytes=vmem_limit),
    )(xpad, w_mat)

    # Finalize training-mode BatchNorm statistics (exact over the whole batch).
    count = float(N * Ho * Wo)
    s = jnp.sum(stats[:, :, 0], axis=0)                    # (Cout,)
    ss = jnp.sum(stats[:, :, 1], axis=0)                   # (Cout,)
    mean = s / count
    var = jnp.maximum(ss / count - mean * mean, 0.0)       # biased variance
    scale = gamma * jax.lax.rsqrt(var + _BN_EPS)
    bias = beta - mean * scale

    # Channel-major affine + contiguous reshape: XLA fuses this into a single
    # read+write of y; output is already NCHW (no trailing transpose).
    out = y * scale[None, :, None] + bias[None, :, None]   # (N, Cout, Ho*Wo)
    return out.reshape(N, Cout, Ho, Wo)


def init_params(key, in_planes, out_planes, kernel_size):
    """Shapes/values of a freshly constructed BasicConv2d1 (used parts only)."""
    fan_in = in_planes * kernel_size * kernel_size
    bound = (1.0 / fan_in) ** 0.5
    weight = jax.random.uniform(
        key, (out_planes, in_planes, kernel_size, kernel_size),
        jnp.float32, -bound, bound)
    return dict(weight=weight,
                gamma=jnp.ones((out_planes,), jnp.float32),   # BN default affine
                beta=jnp.zeros((out_planes,), jnp.float32))


def _reference(x, weight, gamma, beta, *, stride, padding, dilation):
    """Pure-JAX reference: conv (bias=False) + training-mode BatchNorm."""
    y = jax.lax.conv_general_dilated(
        x, weight, window_strides=(stride, stride),
        padding=[(padding, padding), (padding, padding)],
        rhs_dilation=(dilation, dilation),
        dimension_numbers=("NCHW", "OIHW", "NCHW"),
        precision=jax.lax.Precision.HIGHEST)
    mean = jnp.mean(y, axis=(0, 2, 3), keepdims=True)
    var = jnp.mean((y - mean) ** 2, axis=(0, 2, 3), keepdims=True)
    g = gamma.reshape(1, -1, 1, 1)
    b = beta.reshape(1, -1, 1, 1)
    return g * (y - mean) * jax.lax.rsqrt(var + _BN_EPS) + b


if __name__ == "__main__":
    key = jax.random.PRNGKey(0)
    kx, kp = jax.random.split(key)

    in_planes, out_planes = 4, 8
    kernel_size, stride, padding, dilation = 3, 1, 1, 1
    x = jax.random.normal(kx, (2, in_planes, 16, 16), jnp.float32)   # NCHW
    params = init_params(kp, in_planes, out_planes, kernel_size)

    fwd = jax.jit(functools.partial(basic_conv2d1_forward, stride=stride,
                                    padding=padding, dilation=dilation))
    y = jax.block_until_ready(fwd(x, params))

    assert y.shape == (2, out_planes, 16, 16), y.shape
    assert bool(jnp.all(jnp.isfinite(y)))

    # (a) precision-matched reference: inputs/weights rounded through bf16 like
    #     the kernel's wrapper-side casts (MXU products are exact in f32).
    x_b = x.astype(jnp.bfloat16).astype(jnp.float32)
    w_b = params["weight"].astype(jnp.bfloat16).astype(jnp.float32)
    y_ref_b = _reference(x_b, w_b, params["gamma"], params["beta"],
                         stride=stride, padding=padding, dilation=dilation)
    err_b = float(jnp.max(jnp.abs(y - y_ref_b)))
    assert err_b < 5e-3, f"mismatch vs bf16-matched reference: {err_b}"

    # (b) full-f32 reference of the original module; loose bound covers the
    #     bf16 input/weight quantization of the MXU path.
    y_ref = _reference(x, params["weight"], params["gamma"], params["beta"],
                       stride=stride, padding=padding, dilation=dilation)
    err = float(jnp.max(jnp.abs(y - y_ref)))
    assert err < 5e-2, f"mismatch vs f32 reference: {err}"

    print("KERNEL_OK")
</pallas_src>

<mosaic_0001>
module attributes {stable_mosaic.version = 11 : i64} {
  func.func @_conv_bn_stats_kernel(%arg0: i32, %arg1: memref<1x4x18x18xbf16, #tpu.memory_space<vmem>>, %arg2: memref<8x36xbf16, #tpu.memory_space<vmem>>, %arg3: memref<1x8x256xf32, #tpu.memory_space<vmem>>, %arg4: memref<1x8x2xf32, #tpu.memory_space<vmem>>) attributes {dimension_semantics = [#tpu.dimension_semantics<parallel>], iteration_bounds = array<i64: 2>, scalar_prefetch = 0 : i64, scratch_operands = 0 : i64, tpu.core_type = #tpu.core_type<tc>, window_params = [{transform_indices = @transform_0, window_bounds = array<i64: 1, 4, 18, 18>}, {pipeline_mode = #tpu.pipeline_mode<synchronous>, transform_indices = @transform_1, window_bounds = array<i64: 8, 36>}, {transform_indices = @transform_2, window_bounds = array<i64: 1, 8, 256>}, {transform_indices = @transform_3, window_bounds = array<i64: 1, 8, 2>}]} {
    %c0 = arith.constant 0 : index
    %c0_0 = arith.constant 0 : index
    %c0_1 = arith.constant 0 : index
    %c0_2 = arith.constant 0 : index
    %0 = vector.load %arg1[%c0, %c0_0, %c0_1, %c0_2] : memref<1x4x18x18xbf16, #tpu.memory_space<vmem>>, vector<1x4x18x18xbf16>
    %1 = vector.shape_cast %0 : vector<1x4x18x18xbf16> to vector<4x18x18xbf16>
    %2 = vector.extract_strided_slice %1 {offsets = [0, 0, 0], sizes = [4, 16, 16], strides = [1, 1, 1]} : vector<4x18x18xbf16> to vector<4x16x16xbf16>
    %3 = vector.shape_cast %2 : vector<4x16x16xbf16> to vector<4x256xbf16>
    %4 = vector.extract_strided_slice %1 {offsets = [0, 0, 1], sizes = [4, 16, 16], strides = [1, 1, 1]} : vector<4x18x18xbf16> to vector<4x16x16xbf16>
    %5 = vector.shape_cast %4 : vector<4x16x16xbf16> to vector<4x256xbf16>
    %6 = vector.extract_strided_slice %1 {offsets = [0, 0, 2], sizes = [4, 16, 16], strides = [1, 1, 1]} : vector<4x18x18xbf16> to vector<4x16x16xbf16>
    %7 = vector.shape_cast %6 : vector<4x16x16xbf16> to vector<4x256xbf16>
    %8 = vector.extract_strided_slice %1 {offsets = [0, 1, 0], sizes = [4, 16, 16], strides = [1, 1, 1]} : vector<4x18x18xbf16> to vector<4x16x16xbf16>
    %9 = vector.shape_cast %8 : vector<4x16x16xbf16> to vector<4x256xbf16>
    %10 = vector.extract_strided_slice %1 {offsets = [0, 1, 1], sizes = [4, 16, 16], strides = [1, 1, 1]} : vector<4x18x18xbf16> to vector<4x16x16xbf16>
    %11 = vector.shape_cast %10 : vector<4x16x16xbf16> to vector<4x256xbf16>
    %12 = vector.extract_strided_slice %1 {offsets = [0, 1, 2], sizes = [4, 16, 16], strides = [1, 1, 1]} : vector<4x18x18xbf16> to vector<4x16x16xbf16>
    %13 = vector.shape_cast %12 : vector<4x16x16xbf16> to vector<4x256xbf16>
    %14 = vector.extract_strided_slice %1 {offsets = [0, 2, 0], sizes = [4, 16, 16], strides = [1, 1, 1]} : vector<4x18x18xbf16> to vector<4x16x16xbf16>
    %15 = vector.shape_cast %14 : vector<4x16x16xbf16> to vector<4x256xbf16>
    %16 = vector.extract_strided_slice %1 {offsets = [0, 2, 1], sizes = [4, 16, 16], strides = [1, 1, 1]} : vector<4x18x18xbf16> to vector<4x16x16xbf16>
    %17 = vector.shape_cast %16 : vector<4x16x16xbf16> to vector<4x256xbf16>
    %18 = vector.extract_strided_slice %1 {offsets = [0, 2, 2], sizes = [4, 16, 16], strides = [1, 1, 1]} : vector<4x18x18xbf16> to vector<4x16x16xbf16>
    %19 = vector.shape_cast %18 : vector<4x16x16xbf16> to vector<4x256xbf16>
    %20 = tpu.concatenate %3, %5, %7, %9, %11, %13, %15, %17, %19 in 0 : vector<4x256xbf16>, vector<4x256xbf16>, vector<4x256xbf16>, vector<4x256xbf16>, vector<4x256xbf16>, vector<4x256xbf16>, vector<4x256xbf16>, vector<4x256xbf16>, vector<4x256xbf16> -> vector<36x256xbf16>
    %c0_3 = arith.constant 0 : index
    %c0_4 = arith.constant 0 : index
    %21 = vector.load %arg2[%c0_3, %c0_4] : memref<8x36xbf16, #tpu.memory_space<vmem>>, vector<8x36xbf16>
    %cst = arith.constant dense<0.000000e+00> : vector<8x256xf32>
    %22 = tpu.matmul %21, %20, %cst {dimension_numbers = #tpu.dot_dimension_numbers<[1], [0], [0], [1], [0, 0, 1, 1], [], []>} : vector<8x36xbf16>, vector<36x256xbf16>, vector<8x256xf32> -> vector<8x256xf32>
    %c0_5 = arith.constant 0 : index
    %c0_6 = arith.constant 0 : index
    %c0_7 = arith.constant 0 : index
    %23 = vector.load %arg3[%c0_5, %c0_6, %c0_7] : memref<1x8x256xf32, #tpu.memory_space<vmem>>, vector<1x8x256xf32>
    %24 = vector.shape_cast %23 : vector<1x8x256xf32> to vector<8x256xf32>
    %25 = vector.shape_cast %22 : vector<8x256xf32> to vector<1x8x256xf32>
    tpu.vector_store %arg3[%c0_5, %c0_6, %c0_7], %25 {strides = array<i32>} : memref<1x8x256xf32, #tpu.memory_space<vmem>>, vector<1x8x256xf32>,
    %cst_8 = arith.constant dense<0.000000e+00> : vector<8xf32>
    %26 = vector.multi_reduction <add>, %22, %cst_8 [1] : vector<8x256xf32> to vector<8xf32>
    %27 = vector.shape_cast %26 : vector<8xf32> to vector<8x1xf32>
    %28 = arith.mulf %22, %22 : vector<8x256xf32>
    %cst_9 = arith.constant dense<0.000000e+00> : vector<8xf32>
    %29 = vector.multi_reduction <add>, %28, %cst_9 [1] : vector<8x256xf32> to vector<8xf32>
    %30 = vector.shape_cast %29 : vector<8xf32> to vector<8x1xf32>
    %31 = tpu.concatenate %27, %30 in 1 : vector<8x1xf32>, vector<8x1xf32> -> vector<8x2xf32>
    %c0_10 = arith.constant 0 : index
    %c0_11 = arith.constant 0 : index
    %c0_12 = arith.constant 0 : index
    %32 = vector.load %arg4[%c0_10, %c0_11, %c0_12] : memref<1x8x2xf32, #tpu.memory_space<vmem>>, vector<1x8x2xf32>
    %33 = vector.shape_cast %32 : vector<1x8x2xf32> to vector<8x2xf32>
    %34 = vector.shape_cast %31 : vector<8x2xf32> to vector<1x8x2xf32>
    tpu.vector_store %arg4[%c0_10, %c0_11, %c0_12], %34 {strides = array<i32>} : memref<1x8x2xf32, #tpu.memory_space<vmem>>, vector<1x8x2xf32>,
    return
  }
  func.func @transform_0(%arg0: i32) -> (i32, i32, i32, i32) {
    %c0_i32 = arith.constant 0 : i32
    %c0_i32_0 = arith.constant 0 : i32
    %c0_i32_1 = arith.constant 0 : i32
    %c0_i32_2 = arith.constant 0 : i32
    return %arg0, %c0_i32, %c0_i32_0, %c0_i32_1 : i32, i32, i32, i32
  }
  func.func @transform_1(%arg0: i32) -> (i32, i32) {
    %c0_i32 = arith.constant 0 : i32
    %c0_i32_0 = arith.constant 0 : i32
    %c0_i32_1 = arith.constant 0 : i32
    return %c0_i32, %c0_i32_0 : i32, i32
  }
  func.func @transform_2(%arg0: i32) -> (i32, i32, i32) {
    %c0_i32 = arith.constant 0 : i32
    %c0_i32_0 = arith.constant 0 : i32
    %c0_i32_1 = arith.constant 0 : i32
    return %arg0, %c0_i32, %c0_i32_0 : i32, i32, i32
  }
  func.func @transform_3(%arg0: i32) -> (i32, i32, i32) {
    %c0_i32 = arith.constant 0 : i32
    %c0_i32_0 = arith.constant 0 : i32
    %c0_i32_1 = arith.constant 0 : i32
    return %arg0, %c0_i32, %c0_i32_0 : i32, i32, i32
  }
}

</mosaic_0001>

<llo_original>
// kernel: basic_conv2d1_forward.1
$region0: #{basic_conv2d1_forward.1}
  #allocation0 [shape = 'u32[]', space=smem, size = 0x4, offset = 0x4, fixed_abs, tag = 'smem constant byte address 0x4 - core index']
  #allocation1 [shape = 'u32[144,128]{1,0:T(1,128)}', space=vmem, size = 0x12000, scoped, tag = 'internal scratch']
  %s0 = inlined_call_operand.vmem [shape: bf16[2,4,18,18], index: 0, kind: input, shape index: {}]
  %s1 = inlined_call_operand.vmem [shape: bf16[8,36], index: 1, kind: input, shape index: {}]
  %s2 = inlined_call_operand.vmem [shape: f32[2,8,256], index: 2, kind: output, shape index: {0}]
  %s3 = inlined_call_operand.vmem [shape: f32[2,8,2], index: 3, kind: output, shape index: {1}]
  %4 = xla_tuple %s2, %s3
  %s5 = sld [smem:[#allocation0]]
  $region49: #{basic_conv2d1_forward.1} parent=0
    _
  %s7 = ssub.s32 1, %s5
  %s8 = scalar_select 0, %s7, %s5
  loop: start=0, step=1, limit=4
  $region2: #{basic_conv2d1_forward.1} parent=0 // loop_pre_header
    _
  $region3: #{basic_conv2d1_forward.1} parent=0 // loop_header
    %s10 = sphi 0, %s14
    %p11 = scmp.ge.s32.totalorder %s10, 4
    %s20 = sphi 0, %s22
    %s23 = sphi 0, %s20
    %s24 = sphi 0, %s23
    %s40 = sphi 0, %s24
    %s44 = sphi 0, %s44
    %s46 = sphi 0, %s44
    %s47 = sphi 0, %s46
    %s61 = sphi 0, %s47
    %s67 = sphi 0, %s69
    %s70 = sphi 0, %s67
    %s71 = sphi 0, %s70
    %s87 = sphi 0, %s71
    %s93 = sphi 0, %s95
    %s96 = sphi 0, %s93
    %s97 = sphi 0, %s96
    %s113 = sphi 0, %s97
  $region4: #{basic_conv2d1_forward.1} parent=0 // loop_header_branch
    %13 = sbr.rel (%p11) target = $region8
  $region5: #{basic_conv2d1_forward.1} parent=0 // loop_body
    %s15 = ssub.s32 %s10, 1
    %s16 = ssub.s32 %s10, 2
    %s17 = sadd.s32 %s10, 1
    %s18 = ssub.s32 %s10, %s17
    %p19 = scmp.eq.s32.totalorder %s18, 0
    %s21 = sadd.s32 %s20, 1
    %s22 = scalar_select %p19, %s20, %s21
    %p25 = pneg %p19
    %p26 = scmp.eq.s32.totalorder %s10, 1
    %p27 = por %p25, %p26
    %p28 = scmp.ne.s32.totalorder %s20, %s23
    %p29 = scmp.eq.s32.totalorder %s10, 0
    %p30 = por %p28, %p29
    %p31 = scmp.ne.s32.totalorder %s20, %s23
    %p32 = scmp.eq.s32.totalorder %s15, 1
    %p33 = por %p31, %p32
    %p34 = scmp.ne.s32.totalorder %s23, %s24
    %p35 = scmp.eq.s32.totalorder %s15, 0
    %p36 = por %p34, %p35
    %p37 = scmp.ne.s32.totalorder %s23, %s24
    %p38 = scmp.eq.s32.totalorder %s16, 1
    %p39 = por %p37, %p38
    %p41 = scmp.ne.s32.totalorder %s24, %s40
    %p42 = scmp.eq.s32.totalorder %s16, 0
    %p43 = por %p41, %p42
    %s45 = sadd.s32 %s44, 1
    %p48 = scmp.eq.s32.totalorder %s10, 1
    %p49 = scmp.ne.s32.totalorder %s44, %s46
    %p50 = scmp.eq.s32.totalorder %s10, 0
    %p51 = por %p49, %p50
    %p52 = scmp.ne.s32.totalorder %s44, %s46
    %p53 = scmp.eq.s32.totalorder %s15, 1
    %p54 = por %p52, %p53
    %p55 = scmp.ne.s32.totalorder %s46, %s47
    %p56 = scmp.eq.s32.totalorder %s15, 0
    %p57 = por %p55, %p56
    %p58 = scmp.ne.s32.totalorder %s46, %s47
    %p59 = scmp.eq.s32.totalorder %s16, 1
    %p60 = por %p58, %p59
    %p62 = scmp.ne.s32.totalorder %s47, %s61
    %p63 = scmp.eq.s32.totalorder %s16, 0
    %p64 = por %p62, %p63
    %s65 = ssub.s32 %s10, %s17
    %p66 = scmp.eq.s32.totalorder %s65, 0
    %s68 = sadd.s32 %s67, 1
    %s69 = scalar_select %p66, %s67, %s68
    %p72 = pneg %p66
    %p73 = scmp.eq.s32.totalorder %s10, 1
    %p74 = por %p72, %p73
    %p75 = scmp.ne.s32.totalorder %s67, %s70
    %p76 = scmp.eq.s32.totalorder %s10, 0
    %p77 = por %p75, %p76
    %p78 = scmp.ne.s32.totalorder %s67, %s70
    %p79 = scmp.eq.s32.totalorder %s15, 1
    %p80 = por %p78, %p79
    %p81 = scmp.ne.s32.totalorder %s70, %s71
    %p82 = scmp.eq.s32.totalorder %s15, 0
    %p83 = por %p81, %p82
    %p84 = scmp.ne.s32.totalorder %s70, %s71
    %p85 = scmp.eq.s32.totalorder %s16, 1
    %p86 = por %p84, %p85
    %p88 = scmp.ne.s32.totalorder %s71, %s87
    %p89 = scmp.eq.s32.totalorder %s16, 0
    %p90 = por %p88, %p89
    %s91 = ssub.s32 %s10, %s17
    %p92 = scmp.eq.s32.totalorder %s91, 0
    %s94 = sadd.s32 %s93, 1
    %s95 = scalar_select %p92, %s93, %s94
    %p98 = pneg %p92
    %p99 = scmp.eq.s32.totalorder %s10, 1
    %p100 = por %p98, %p99
    %p101 = scmp.ne.s32.totalorder %s93, %s96
    %p102 = scmp.eq.s32.totalorder %s10, 0
    %p103 = por %p101, %p102
    %p104 = scmp.ne.s32.totalorder %s93, %s96
    %p105 = scmp.eq.s32.totalorder %s15, 1
    %p106 = por %p104, %p105
    %p107 = scmp.ne.s32.totalorder %s96, %s97
    %p108 = scmp.eq.s32.totalorder %s15, 0
    %p109 = por %p107, %p108
    %p110 = scmp.ne.s32.totalorder %s96, %s97
    %p111 = scmp.eq.s32.totalorder %s16, 1
    %p112 = por %p110, %p111
    %p114 = scmp.ne.s32.totalorder %s97, %s113
    %p115 = scmp.eq.s32.totalorder %s16, 0
    %p116 = por %p114, %p115
    %p117 = scmp.le.s32.totalorder 1, %s10
    %p118 = scmp.lt.s32.totalorder %s10, 3
    %p119 = pnand %p117, %p118
    %p120 = pneg %p119
    // Predicated region
    $region9: #{basic_conv2d1_forward.1} parent=5 // pred_check
      _
    $region10: #{basic_conv2d1_forward.1} parent=5 // pred_check_branch
      %122 = sbr.rel (%p119) target = $region12
    $region11: #{basic_conv2d1_forward.1} parent=5 // pred_region
      %s123 = ssub.s32 %s10, 1
      // Predicated region
      $region13: #{basic_conv2d1_forward.1} parent=11 // pred_check
        %p124 = pneg %p57
      $region14: #{basic_conv2d1_forward.1} parent=11 // pred_check_branch
        %126 = sbr.rel (%p124) target = $region16
      $region15: #{basic_conv2d1_forward.1} parent=11 // pred_region
        _
      $region16: #{basic_conv2d1_forward.1} parent=11 // pred_fallthru
        _
    $region12: #{basic_conv2d1_forward.1} parent=5 // pred_fallthru
      _
    %p127 = scmp.lt.s32.totalorder %s10, 2
    // Predicated region
    $region17: #{basic_conv2d1_forward.1} parent=5 // pred_check
      %p128 = pneg %p127
    $region18: #{basic_conv2d1_forward.1} parent=5 // pred_check_branch
      %130 = sbr.rel (%p128) target = $region20
    $region19: #{basic_conv2d1_forward.1} parent=5 // pred_region
      // Predicated region
      $region21: #{basic_conv2d1_forward.1} parent=19 // pred_check
        %p131 = pneg %p30
      $region22: #{basic_conv2d1_forward.1} parent=19 // pred_check_branch
        %133 = sbr.rel (%p131) target = $region24
      $region23: #{basic_conv2d1_forward.1} parent=19 // pred_region
        %p134 = scmp.lt.s32.totalorder %s10, 1
        %s135 = scalar_select %p134, %s10, 1
        %s136 = smul.addr %s135, 12
        %s137 = smul.addr %s136, 4
        %s138 = scalar_lea.vmem %s0, %s137
      $region24: #{basic_conv2d1_forward.1} parent=19 // pred_fallthru
        _
    $region20: #{basic_conv2d1_forward.1} parent=5 // pred_fallthru
      _
    %p139 = scmp.le.s32.totalorder 1, %s10
    %p140 = scmp.lt.s32.totalorder %s10, 3
    %p141 = pnand %p139, %p140
    %p142 = pneg %p141
    // Predicated region
    $region25: #{basic_conv2d1_forward.1} parent=5 // pred_check
      _
    $region26: #{basic_conv2d1_forward.1} parent=5 // pred_check_branch
      %144 = sbr.rel (%p141) target = $region28
    $region27: #{basic_conv2d1_forward.1} parent=5 // pred_region
      %s145 = ssub.s32 %s10, 1
      %p146 = scmp.lt.s32.totalorder %s15, 1
      %s147 = scalar_select %p146, %s15, 1
      %s148 = smul.addr %s147, 12
      %s149 = smul.addr %s148, 4
      %s150 = scalar_lea.vmem %s0, %s149
      %p151 = pneg %p36
      %p152 = pneg %p33
      %p153 = pneg %p57
      %p154 = pneg %p54
      %p155 = pneg %p83
      %p156 = pneg %p80
      %p157 = scmp.lt.s32.totalorder %s15, 1
      %s158 = scalar_select %p157, %s15, 1
      %s159 = smul.addr %s158, 2
      %s160 = smul.addr %s159, 8
      %s161 = scalar_lea.vmem %s2, %s160
      %p162 = pneg %p109
      %p163 = pneg %p106
      %p164 = scmp.lt.s32.totalorder %s15, 1
      %s165 = scalar_select %p164, %s15, 1
      %s166 = smul.addr %s165, 8
      %s167 = scalar_lea.vmem %s3, %s166
      %p168 = scmp.lt.s32.totalorder %s15, 1
      %s169 = scalar_select %p168, %s15, 1
      %s170 = smul.addr %s169, 12
      %s171 = smul.addr %s170, 4
      %s172 = scalar_lea.vmem %s0, %s171
      %p173 = scmp.lt.s32.totalorder %s15, 1
      %s174 = scalar_select %p173, %s15, 1
      %s175 = smul.addr %s174, 2
      %s176 = smul.addr %s175, 8
      %s177 = scalar_lea.vmem %s2, %s176
      %p178 = scmp.lt.s32.totalorder %s15, 1
      %s179 = scalar_select %p178, %s15, 1
      %s180 = smul.addr %s179, 8
      %s181 = scalar_lea.vmem %s3, %s180
      %v183 = vld [vmem:[%s172] sm:$0xf]
      %v184 = vld [vmem:[%s172 + $0x4] sm:$0xf]
      %v185 = vld [vmem:[%s172 + $0x8] sm:$0x1]
      %v186 = vld [vmem:[%s172 + $0xc] sm:$0xf]
      %v187 = vld [vmem:[%s172 + $0x10] sm:$0xf]
      %v188 = vld [vmem:[%s172 + $0x14] sm:$0x1]
      %v189 = vld [vmem:[%s172 + $0x18] sm:$0xf]
      %v190 = vld [vmem:[%s172 + $0x1c] sm:$0xf]
      %v191 = vld [vmem:[%s172 + $0x20] sm:$0x1]
      %v192 = vld [vmem:[%s172 + $0x24] sm:$0xf]
      %v193 = vld [vmem:[%s172 + $0x28] sm:$0xf]
      %v194 = vld [vmem:[%s172 + $0x2c] sm:$0x1]
      %v197 = vpack.i.b16 %v186, %v183
      %v198 = vshrl.u32 %v183, 16
      %v199 = vshrl.u32 %v186, 16
      %v200 = vpack.i.b16 %v199, %v198
      %v203 = vpack.i.b16 %v192, %v189
      %v204 = vshrl.u32 %v189, 16
      %v205 = vshrl.u32 %v192, 16
      %v206 = vpack.i.b16 %v205, %v204
      %v209 = vpack.i.b16 %v187, %v184
      %v210 = vshrl.u32 %v184, 16
      %v211 = vshrl.u32 %v187, 16
      %v212 = vpack.i.b16 %v211, %v210
      %v215 = vpack.i.b16 %v193, %v190
      %v216 = vshrl.u32 %v190, 16
      %v217 = vshrl.u32 %v193, 16
      %v218 = vpack.i.b16 %v217, %v216
      %v221 = vunpack.c.l.s4 1983009808
      %v222 = vunpack.c.0.s8 %v221
      %v223 = vlaneseq
      %v224 = vshrl.u32 %v223, 7
      %v225 = vsub.s32 %v222, %v224
      %v226 = vrot.slane %v197, %v225
      %v229 = vunpack.c.l.s4 1983009808
      %v230 = vunpack.c.0.s8 %v229
      %v231 = vlaneseq
      %v232 = vshrl.u32 %v231, 7
      %v233 = vsub.s32 %v230, %v232
      %v234 = vrot.slane %v203, %v233
      %v235 = vcombine.low %v226, %v234
      %v236 = vcombine.high %v226, %v234
      %v238 = vunpack.c.l.s4 1934713408
      %v239 = vunpack.c.0.s8 %v238
      %v240 = vlaneseq
      %v241 = vshrl.u32 %v240, 7
      %v242 = vsub.s32 %v239, %v241
      %v243 = vrot.slane %v235, %v242
      %v245 = vunpack.c.l.s4 1934713408
      %v246 = vunpack.c.0.s8 %v245
      %v247 = vlaneseq
      %v248 = vshrl.u32 %v247, 7
      %v249 = vsub.s32 %v246, %v248
      %v250 = vrot.slane %v236, %v249
      %v251 = vcombine.high %v243, 0
      %v252 = vcombine.high %v250, 0
      %v255 = vunpack.c.l.s4 1983009808
      %v256 = vunpack.c.0.s8 %v255
      %v257 = vlaneseq
      %v258 = vshrl.u32 %v257, 7
      %v259 = vsub.s32 %v256, %v258
      %v260 = vrot.slane %v200, %v259
      %v263 = vunpack.c.l.s4 1983009808
      %v264 = vunpack.c.0.s8 %v263
      %v265 = vlaneseq
      %v266 = vshrl.u32 %v265, 7
      %v267 = vsub.s32 %v264, %v266
      %v268 = vrot.slane %v206, %v267
      %v269 = vcombine.low %v260, %v268
      %v270 = vcombine.high %v260, %v268
      %v272 = vunpack.c.l.s4 1934713408
      %v273 = vunpack.c.0.s8 %v272
      %v274 = vlaneseq
      %v275 = vshrl.u32 %v274, 7
      %v276 = vsub.s32 %v273, %v275
      %v277 = vrot.slane %v269, %v276
      %v279 = vunpack.c.l.s4 1934713408
      %v280 = vunpack.c.0.s8 %v279
      %v281 = vlaneseq
      %v282 = vshrl.u32 %v281, 7
      %v283 = vsub.s32 %v280, %v282
      %v284 = vrot.slane %v270, %v283
      %v285 = vcombine.high %v277, 0
      %v286 = vcombine.high %v284, 0
      %v289 = vunpack.c.l.s4 1983009808
      %v290 = vunpack.c.0.s8 %v289
      %v291 = vlaneseq
      %v292 = vshrl.u32 %v291, 7
      %v293 = vsub.s32 %v290, %v292
      %v294 = vrot.slane %v209, %v293
      %v297 = vunpack.c.l.s4 1983009808
      %v298 = vunpack.c.0.s8 %v297
      %v299 = vlaneseq
      %v300 = vshrl.u32 %v299, 7
      %v301 = vsub.s32 %v298, %v300
      %v302 = vrot.slane %v215, %v301
      %v303 = vcombine.low %v294, %v302
      %v304 = vcombine.high %v294, %v302
      %v306 = vunpack.c.l.s4 1934713408
      %v307 = vunpack.c.0.s8 %v306
      %v308 = vlaneseq
      %v309 = vshrl.u32 %v308, 7
      %v310 = vsub.s32 %v307, %v309
      %v311 = vrot.slane %v303, %v310
      %v313 = vunpack.c.l.s4 1934713408
      %v314 = vunpack.c.0.s8 %v313
      %v315 = vlaneseq
      %v316 = vshrl.u32 %v315, 7
      %v317 = vsub.s32 %v314, %v316
      %v318 = vrot.slane %v304, %v317
      %v319 = vcombine.high %v311, 0
      %v320 = vcombine.high %v318, 0
      %v323 = vunpack.c.l.s4 1983009808
      %v324 = vunpack.c.0.s8 %v323
      %v325 = vlaneseq
      %v326 = vshrl.u32 %v325, 7
      %v327 = vsub.s32 %v324, %v326
      %v328 = vrot.slane %v212, %v327
      %v331 = vunpack.c.l.s4 1983009808
      %v332 = vunpack.c.0.s8 %v331
      %v333 = vlaneseq
      %v334 = vshrl.u32 %v333, 7
      %v335 = vsub.s32 %v332, %v334
      %v336 = vrot.slane %v218, %v335
      %v337 = vcombine.low %v328, %v336
      %v338 = vcombine.high %v328, %v336
      %v340 = vunpack.c.l.s4 1934713408
      %v341 = vunpack.c.0.s8 %v340
      %v342 = vlaneseq
      %v343 = vshrl.u32 %v342, 7
      %v344 = vsub.s32 %v341, %v343
      %v345 = vrot.slane %v337, %v344
      %v347 = vunpack.c.l.s4 1934713408
      %v348 = vunpack.c.0.s8 %v347
      %v349 = vlaneseq
      %v350 = vshrl.u32 %v349, 7
      %v351 = vsub.s32 %v348, %v350
      %v352 = vrot.slane %v338, %v351
      %v353 = vcombine.high %v345, 0
      %v354 = vcombine.high %v352, 0
      %v356 = vunpack.c.l.b16 %v277
      %v357 = vpack.c.b16 %v356, %v356
      %358 = vrot.lane.b32.xlu0 %v357, 16
      %v359 = vpop.permute.xlu0 %358
      %v361 = vunpack.c.l.b16 %v251
      %v362 = vpack.c.b16 %v361, %v361
      %363 = vrot.lane.b32.xlu0 %v362, 32
      %v364 = vpop.permute.xlu0 %363
      %v366 = vunpack.c.l.b16 %v285
      %v367 = vpack.c.b16 %v366, %v366
      %368 = vrot.lane.b32.xlu0 %v367, 48
      %v369 = vpop.permute.xlu0 %368
      %v371 = vunpack.c.l.b16 %v250
      %v372 = vpack.c.b16 %v371, %v371
      %373 = vrot.lane.b32.xlu0 %v372, 64
      %v374 = vpop.permute.xlu0 %373
      %v376 = vunpack.c.l.b16 %v284
      %v377 = vpack.c.b16 %v376, %v376
      %378 = vrot.lane.b32.xlu0 %v377, 80
      %v379 = vpop.permute.xlu0 %378
      %v381 = vunpack.c.l.b16 %v252
      %v382 = vpack.c.b16 %v381, %v381
      %383 = vrot.lane.b32.xlu0 %v382, 96
      %v384 = vpop.permute.xlu0 %383
      %v386 = vunpack.c.l.b16 %v286
      %v387 = vpack.c.b16 %v386, %v386
      %388 = vrot.lane.b32.xlu0 %v387, 112
      %v389 = vpop.permute.xlu0 %388
      %v391 = vunpack.c.l.b16 %v345
      %v392 = vpack.c.b16 %v391, %v391
      %393 = vrot.lane.b32.xlu0 %v392, 16
      %v394 = vpop.permute.xlu0 %393
      %v396 = vunpack.c.l.b16 %v319
      %v397 = vpack.c.b16 %v396, %v396
      %398 = vrot.lane.b32.xlu0 %v397, 32
      %v399 = vpop.permute.xlu0 %398
      %v401 = vunpack.c.l.b16 %v353
      %v402 = vpack.c.b16 %v401, %v401
      %403 = vrot.lane.b32.xlu0 %v402, 48
      %v404 = vpop.permute.xlu0 %403
      %v406 = vunpack.c.l.b16 %v318
      %v407 = vpack.c.b16 %v406, %v406
      %408 = vrot.lane.b32.xlu0 %v407, 64
      %v409 = vpop.permute.xlu0 %408
      %v411 = vunpack.c.l.b16 %v352
      %v412 = vpack.c.b16 %v411, %v411
      %413 = vrot.lane.b32.xlu0 %v412, 80
      %v414 = vpop.permute.xlu0 %413
      %v416 = vunpack.c.l.b16 %v320
      %v417 = vpack.c.b16 %v416, %v416
      %418 = vrot.lane.b32.xlu0 %v417, 96
      %v419 = vpop.permute.xlu0 %418
      %v421 = vunpack.c.l.b16 %v354
      %v422 = vpack.c.b16 %v421, %v421
      %423 = vrot.lane.b32.xlu0 %v422, 112
      %v424 = vpop.permute.xlu0 %423
      %vm425 = vcmask 130048
      %v428 = vsel %vm425, %v243, %v359
      %vm429 = vcmask 261120
      %v431 = vsel %vm429, %v428, %v364
      %vm432 = vcmask 392192
      %v434 = vsel %vm432, %v431, %v369
      %vm435 = vcmask 523264
      %v437 = vsel %vm435, %v434, %v374
      %vm438 = vcmask 654336
      %v440 = vsel %vm438, %v437, %v379
      %vm441 = vcmask 785408
      %v443 = vsel %vm441, %v440, %v384
      %vm444 = vcmask 916480
      %v446 = vsel %vm444, %v443, %v389
      %v449 = vsel %vm425, %v311, %v394
      %v451 = vsel %vm429, %v449, %v399
      %v453 = vsel %vm432, %v451, %v404
      %v455 = vsel %vm435, %v453, %v409
      %v457 = vsel %vm438, %v455, %v414
      %v459 = vsel %vm441, %v457, %v419
      %v461 = vsel %vm444, %v459, %v424
      %470 = vrot.lane.b32.xlu0 %v183, 127
      %v471 = vpop.permute.xlu0 %470
      %472 = vrot.lane.b32.xlu0 %v184, 127
      %v473 = vpop.permute.xlu0 %472
      %474 = vrot.lane.b32.xlu0 %v186, 127
      %v475 = vpop.permute.xlu0 %474
      %476 = vrot.lane.b32.xlu0 %v187, 127
      %v477 = vpop.permute.xlu0 %476
      %478 = vrot.lane.b32.xlu0 %v189, 127
      %v479 = vpop.permute.xlu0 %478
      %480 = vrot.lane.b32.xlu0 %v190, 127
      %v481 = vpop.permute.xlu0 %480
      %482 = vrot.lane.b32.xlu0 %v192, 127
      %v483 = vpop.permute.xlu0 %482
      %484 = vrot.lane.b32.xlu0 %v193, 127
      %v485 = vpop.permute.xlu0 %484
      %v488 = vpack.i.b16 %v475, %v471
      %v489 = vshrl.u32 %v471, 16
      %v490 = vshrl.u32 %v475, 16
      %v491 = vpack.i.b16 %v490, %v489
      %v494 = vpack.i.b16 %v483, %v479
      %v495 = vshrl.u32 %v479, 16
      %v496 = vshrl.u32 %v483, 16
      %v497 = vpack.i.b16 %v496, %v495
      %v500 = vpack.i.b16 %v477, %v473
      %v501 = vshrl.u32 %v473, 16
      %v502 = vshrl.u32 %v477, 16
      %v503 = vpack.i.b16 %v502, %v501
      %v506 = vpack.i.b16 %v485, %v481
      %v507 = vshrl.u32 %v481, 16
      %v508 = vshrl.u32 %v485, 16
      %v509 = vpack.i.b16 %v508, %v507
      %v512 = vunpack.c.l.s4 1983009808
      %v513 = vunpack.c.0.s8 %v512
      %v514 = vlaneseq
      %v515 = vshrl.u32 %v514, 7
      %v516 = vsub.s32 %v513, %v515
      %v517 = vrot.slane %v488, %v516
      %v520 = vunpack.c.l.s4 1983009808
      %v521 = vunpack.c.0.s8 %v520
      %v522 = vlaneseq
      %v523 = vshrl.u32 %v522, 7
      %v524 = vsub.s32 %v521, %v523
      %v525 = vrot.slane %v494, %v524
      %v526 = vcombine.low %v517, %v525
      %v527 = vcombine.high %v517, %v525
      %v529 = vunpack.c.l.s4 1934713408
      %v530 = vunpack.c.0.s8 %v529
      %v531 = vlaneseq
      %v532 = vshrl.u32 %v531, 7
      %v533 = vsub.s32 %v530, %v532
      %v534 = vrot.slane %v526, %v533
      %v536 = vunpack.c.l.s4 1934713408
      %v537 = vunpack.c.0.s8 %v536
      %v538 = vlaneseq
      %v539 = vshrl.u32 %v538, 7
      %v540 = vsub.s32 %v537, %v539
      %v541 = vrot.slane %v527, %v540
      %v542 = vcombine.high %v534, 0
      %v543 = vcombine.high %v541, 0
      %v546 = vunpack.c.l.s4 1983009808
      %v547 = vunpack.c.0.s8 %v546
      %v548 = vlaneseq
      %v549 = vshrl.u32 %v548, 7
      %v550 = vsub.s32 %v547, %v549
      %v551 = vrot.slane %v491, %v550
      %v554 = vunpack.c.l.s4 1983009808
      %v555 = vunpack.c.0.s8 %v554
      %v556 = vlaneseq
      %v557 = vshrl.u32 %v556, 7
      %v558 = vsub.s32 %v555, %v557
      %v559 = vrot.slane %v497, %v558
      %v560 = vcombine.low %v551, %v559
      %v561 = vcombine.high %v551, %v559
      %v563 = vunpack.c.l.s4 1934713408
      %v564 = vunpack.c.0.s8 %v563
      %v565 = vlaneseq
      %v566 = vshrl.u32 %v565, 7
      %v567 = vsub.s32 %v564, %v566
      %v568 = vrot.slane %v560, %v567
      %v570 = vunpack.c.l.s4 1934713408
      %v571 = vunpack.c.0.s8 %v570
      %v572 = vlaneseq
      %v573 = vshrl.u32 %v572, 7
      %v574 = vsub.s32 %v571, %v573
      %v575 = vrot.slane %v561, %v574
      %v576 = vcombine.high %v568, 0
      %v577 = vcombine.high %v575, 0
      %v580 = vunpack.c.l.s4 1983009808
      %v581 = vunpack.c.0.s8 %v580
      %v582 = vlaneseq
      %v583 = vshrl.u32 %v582, 7
      %v584 = vsub.s32 %v581, %v583
      %v585 = vrot.slane %v500, %v584
      %v588 = vunpack.c.l.s4 1983009808
      %v589 = vunpack.c.0.s8 %v588
      %v590 = vlaneseq
      %v591 = vshrl.u32 %v590, 7
      %v592 = vsub.s32 %v589, %v591
      %v593 = vrot.slane %v506, %v592
      %v594 = vcombine.low %v585, %v593
      %v595 = vcombine.high %v585, %v593
      %v597 = vunpack.c.l.s4 1934713408
      %v598 = vunpack.c.0.s8 %v597
      %v599 = vlaneseq
      %v600 = vshrl.u32 %v599, 7
      %v601 = vsub.s32 %v598, %v600
      %v602 = vrot.slane %v594, %v601
      %v604 = vunpack.c.l.s4 1934713408
      %v605 = vunpack.c.0.s8 %v604
      %v606 = vlaneseq
      %v607 = vshrl.u32 %v606, 7
      %v608 = vsub.s32 %v605, %v607
      %v609 = vrot.slane %v595, %v608
      %v610 = vcombine.high %v602, 0
      %v611 = vcombine.high %v609, 0
      %v614 = vunpack.c.l.s4 1983009808
      %v615 = vunpack.c.0.s8 %v614
      %v616 = vlaneseq
      %v617 = vshrl.u32 %v616, 7
      %v618 = vsub.s32 %v615, %v617
      %v619 = vrot.slane %v503, %v618
      %v622 = vunpack.c.l.s4 1983009808
      %v623 = vunpack.c.0.s8 %v622
      %v624 = vlaneseq
      %v625 = vshrl.u32 %v624, 7
      %v626 = vsub.s32 %v623, %v625
      %v627 = vrot.slane %v509, %v626
      %v628 = vcombine.low %v619, %v627
      %v629 = vcombine.high %v619, %v627
      %v631 = vunpack.c.l.s4 1934713408
      %v632 = vunpack.c.0.s8 %v631
      %v633 = vlaneseq
      %v634 = vshrl.u32 %v633, 7
      %v635 = vsub.s32 %v632, %v634
      %v636 = vrot.slane %v628, %v635
      %v638 = vunpack.c.l.s4 1934713408
      %v639 = vunpack.c.0.s8 %v638
      %v640 = vlaneseq
      %v641 = vshrl.u32 %v640, 7
      %v642 = vsub.s32 %v639, %v641
      %v643 = vrot.slane %v629, %v642
      %v644 = vcombine.high %v636, 0
      %v645 = vcombine.high %v643, 0
      %v647 = vunpack.c.l.b16 %v568
      %v648 = vpack.c.b16 %v647, %v647
      %649 = vrot.lane.b32.xlu0 %v648, 16
      %v650 = vpop.permute.xlu0 %649
      %v652 = vunpack.c.l.b16 %v542
      %v653 = vpack.c.b16 %v652, %v652
      %654 = vrot.lane.b32.xlu0 %v653, 32
      %v655 = vpop.permute.xlu0 %654
      %v657 = vunpack.c.l.b16 %v576
      %v658 = vpack.c.b16 %v657, %v657
      %659 = vrot.lane.b32.xlu0 %v658, 48
      %v660 = vpop.permute.xlu0 %659
      %v662 = vunpack.c.l.b16 %v541
      %v663 = vpack.c.b16 %v662, %v662
      %664 = vrot.lane.b32.xlu0 %v663, 64
      %v665 = vpop.permute.xlu0 %664
      %v667 = vunpack.c.l.b16 %v575
      %v668 = vpack.c.b16 %v667, %v667
      %669 = vrot.lane.b32.xlu0 %v668, 80
      %v670 = vpop.permute.xlu0 %669
      %v672 = vunpack.c.l.b16 %v543
      %v673 = vpack.c.b16 %v672, %v672
      %674 = vrot.lane.b32.xlu0 %v673, 96
      %v675 = vpop.permute.xlu0 %674
      %v677 = vunpack.c.l.b16 %v577
      %v678 = vpack.c.b16 %v677, %v677
      %679 = vrot.lane.b32.xlu0 %v678, 112
      %v680 = vpop.permute.xlu0 %679
      %v682 = vunpack.c.l.b16 %v636
      %v683 = vpack.c.b16 %v682, %v682
      %684 = vrot.lane.b32.xlu0 %v683, 16
      %v685 = vpop.permute.xlu0 %684
      %v687 = vunpack.c.l.b16 %v610
      %v688 = vpack.c.b16 %v687, %v687
      %689 = vrot.lane.b32.xlu0 %v688, 32
      %v690 = vpop.permute.xlu0 %689
      %v692 = vunpack.c.l.b16 %v644
      %v693 = vpack.c.b16 %v692, %v692
      %694 = vrot.lane.b32.xlu0 %v693, 48
      %v695 = vpop.permute.xlu0 %694
      %v697 = vunpack.c.l.b16 %v609
      %v698 = vpack.c.b16 %v697, %v697
      %699 = vrot.lane.b32.xlu0 %v698, 64
      %v700 = vpop.permute.xlu0 %699
      %v702 = vunpack.c.l.b16 %v643
      %v703 = vpack.c.b16 %v702, %v702
      %704 = vrot.lane.b32.xlu0 %v703, 80
      %v705 = vpop.permute.xlu0 %704
      %v707 = vunpack.c.l.b16 %v611
      %v708 = vpack.c.b16 %v707, %v707
      %709 = vrot.lane.b32.xlu0 %v708, 96
      %v710 = vpop.permute.xlu0 %709
      %v712 = vunpack.c.l.b16 %v645
      %v713 = vpack.c.b16 %v712, %v712
      %714 = vrot.lane.b32.xlu0 %v713, 112
      %v715 = vpop.permute.xlu0 %714
      %v718 = vsel %vm425, %v534, %v650
      %v720 = vsel %vm429, %v718, %v655
      %v722 = vsel %vm432, %v720, %v660
      %v724 = vsel %vm435, %v722, %v665
      %v726 = vsel %vm438, %v724, %v670
      %v728 = vsel %vm441, %v726, %v675
      %v730 = vsel %vm444, %v728, %v680
      %v733 = vsel %vm425, %v602, %v685
      %v735 = vsel %vm429, %v733, %v690
      %v737 = vsel %vm432, %v735, %v695
      %v739 = vsel %vm435, %v737, %v700
      %v741 = vsel %vm438, %v739, %v705
      %v743 = vsel %vm441, %v741, %v710
      %v745 = vsel %vm444, %v743, %v715
      %746 = vrot.lane.b32.xlu0 %v183, 126
      %v747 = vpop.permute.xlu0 %746
      %748 = vrot.lane.b32.xlu0 %v184, 126
      %v749 = vpop.permute.xlu0 %748
      %750 = vrot.lane.b32.xlu0 %v186, 126
      %v751 = vpop.permute.xlu0 %750
      %752 = vrot.lane.b32.xlu0 %v187, 126
      %v753 = vpop.permute.xlu0 %752
      %754 = vrot.lane.b32.xlu0 %v189, 126
      %v755 = vpop.permute.xlu0 %754
      %756 = vrot.lane.b32.xlu0 %v190, 126
      %v757 = vpop.permute.xlu0 %756
      %758 = vrot.lane.b32.xlu0 %v192, 126
      %v759 = vpop.permute.xlu0 %758
      %760 = vrot.lane.b32.xlu0 %v193, 126
      %v761 = vpop.permute.xlu0 %760
      %v764 = vpack.i.b16 %v751, %v747
      %v765 = vshrl.u32 %v747, 16
      %v766 = vshrl.u32 %v751, 16
      %v767 = vpack.i.b16 %v766, %v765
      %v770 = vpack.i.b16 %v759, %v755
      %v771 = vshrl.u32 %v755, 16
      %v772 = vshrl.u32 %v759, 16
      %v773 = vpack.i.b16 %v772, %v771
      %v776 = vpack.i.b16 %v753, %v749
      %v777 = vshrl.u32 %v749, 16
      %v778 = vshrl.u32 %v753, 16
      %v779 = vpack.i.b16 %v778, %v777
      %v782 = vpack.i.b16 %v761, %v757
      %v783 = vshrl.u32 %v757, 16
      %v784 = vshrl.u32 %v761, 16
      %v785 = vpack.i.b16 %v784, %v783
      %v788 = vunpack.c.l.s4 1983009808
      %v789 = vunpack.c.0.s8 %v788
      %v790 = vlaneseq
      %v791 = vshrl.u32 %v790, 7
      %v792 = vsub.s32 %v789, %v791
      %v793 = vrot.slane %v764, %v792
      %v796 = vunpack.c.l.s4 1983009808
      %v797 = vunpack.c.0.s8 %v796
      %v798 = vlaneseq
      %v799 = vshrl.u32 %v798, 7
      %v800 = vsub.s32 %v797, %v799
      %v801 = vrot.slane %v770, %v800
      %v802 = vcombine.low %v793, %v801
      %v803 = vcombine.high %v793, %v801
      %v805 = vunpack.c.l.s4 1934713408
      %v806 = vunpack.c.0.s8 %v805
      %v807 = vlaneseq
      %v808 = vshrl.u32 %v807, 7
      %v809 = vsub.s32 %v806, %v808
      %v810 = vrot.slane %v802, %v809
      %v812 = vunpack.c.l.s4 1934713408
      %v813 = vunpack.c.0.s8 %v812
      %v814 = vlaneseq
      %v815 = vshrl.u32 %v814, 7
      %v816 = vsub.s32 %v813, %v815
      %v817 = vrot.slane %v803, %v816
      %v818 = vcombine.high %v810, 0
      %v819 = vcombine.high %v817, 0
      %v822 = vunpack.c.l.s4 1983009808
      %v823 = vunpack.c.0.s8 %v822
      %v824 = vlaneseq
      %v825 = vshrl.u32 %v824, 7
      %v826 = vsub.s32 %v823, %v825
      %v827 = vrot.slane %v767, %v826
      %v830 = vunpack.c.l.s4 1983009808
      %v831 = vunpack.c.0.s8 %v830
      %v832 = vlaneseq
      %v833 = vshrl.u32 %v832, 7
      %v834 = vsub.s32 %v831, %v833
      %v835 = vrot.slane %v773, %v834
      %v836 = vcombine.low %v827, %v835
      %v837 = vcombine.high %v827, %v835
      %v839 = vunpack.c.l.s4 1934713408
      %v840 = vunpack.c.0.s8 %v839
      %v841 = vlaneseq
      %v842 = vshrl.u32 %v841, 7
      %v843 = vsub.s32 %v840, %v842
      %v844 = vrot.slane %v836, %v843
      %v846 = vunpack.c.l.s4 1934713408
      %v847 = vunpack.c.0.s8 %v846
      %v848 = vlaneseq
      %v849 = vshrl.u32 %v848, 7
      %v850 = vsub.s32 %v847, %v849
      %v851 = vrot.slane %v837, %v850
      %v852 = vcombine.high %v844, 0
      %v853 = vcombine.high %v851, 0
      %v856 = vunpack.c.l.s4 1983009808
      %v857 = vunpack.c.0.s8 %v856
      %v858 = vlaneseq
      %v859 = vshrl.u32 %v858, 7
      %v860 = vsub.s32 %v857, %v859
      %v861 = vrot.slane %v776, %v860
      %v864 = vunpack.c.l.s4 1983009808
      %v865 = vunpack.c.0.s8 %v864
      %v866 = vlaneseq
      %v867 = vshrl.u32 %v866, 7
      %v868 = vsub.s32 %v865, %v867
      %v869 = vrot.slane %v782, %v868
      %v870 = vcombine.low %v861, %v869
      %v871 = vcombine.high %v861, %v869
      %v873 = vunpack.c.l.s4 1934713408
      %v874 = vunpack.c.0.s8 %v873
      %v875 = vlaneseq
      %v876 = vshrl.u32 %v875, 7
      %v877 = vsub.s32 %v874, %v876
      %v878 = vrot.slane %v870, %v877
      %v880 = vunpack.c.l.s4 1934713408
      %v881 = vunpack.c.0.s8 %v880
      %v882 = vlaneseq
      %v883 = vshrl.u32 %v882, 7
      %v884 = vsub.s32 %v881, %v883
      %v885 = vrot.slane %v871, %v884
      %v886 = vcombine.high %v878, 0
      %v887 = vcombine.high %v885, 0
      %v890 = vunpack.c.l.s4 1983009808
      %v891 = vunpack.c.0.s8 %v890
      %v892 = vlaneseq
      %v893 = vshrl.u32 %v892, 7
      %v894 = vsub.s32 %v891, %v893
      %v895 = vrot.slane %v779, %v894
      %v898 = vunpack.c.l.s4 1983009808
      %v899 = vunpack.c.0.s8 %v898
      %v900 = vlaneseq
      %v901 = vshrl.u32 %v900, 7
      %v902 = vsub.s32 %v899, %v901
      %v903 = vrot.slane %v785, %v902
      %v904 = vcombine.low %v895, %v903
      %v905 = vcombine.high %v895, %v903
      %v907 = vunpack.c.l.s4 1934713408
      %v908 = vunpack.c.0.s8 %v907
      %v909 = vlaneseq
      %v910 = vshrl.u32 %v909, 7
      %v911 = vsub.s32 %v908, %v910
      %v912 = vrot.slane %v904, %v911
      %v914 = vunpack.c.l.s4 1934713408
      %v915 = vunpack.c.0.s8 %v914
      %v916 = vlaneseq
      %v917 = vshrl.u32 %v916, 7
      %v918 = vsub.s32 %v915, %v917
      %v919 = vrot.slane %v905, %v918
      %v920 = vcombine.high %v912, 0
      %v921 = vcombine.high %v919, 0
      %v923 = vunpack.c.l.b16 %v844
      %v924 = vpack.c.b16 %v923, %v923
      %925 = vrot.lane.b32.xlu0 %v924, 16
      %v926 = vpop.permute.xlu0 %925
      %v928 = vunpack.c.l.b16 %v818
      %v929 = vpack.c.b16 %v928, %v928
      %930 = vrot.lane.b32.xlu0 %v929, 32
      %v931 = vpop.permute.xlu0 %930
      %v933 = vunpack.c.l.b16 %v852
      %v934 = vpack.c.b16 %v933, %v933
      %935 = vrot.lane.b32.xlu0 %v934, 48
      %v936 = vpop.permute.xlu0 %935
      %v938 = vunpack.c.l.b16 %v817
      %v939 = vpack.c.b16 %v938, %v938
      %940 = vrot.lane.b32.xlu0 %v939, 64
      %v941 = vpop.permute.xlu0 %940
      %v943 = vunpack.c.l.b16 %v851
      %v944 = vpack.c.b16 %v943, %v943
      %945 = vrot.lane.b32.xlu0 %v944, 80
      %v946 = vpop.permute.xlu0 %945
      %v948 = vunpack.c.l.b16 %v819
      %v949 = vpack.c.b16 %v948, %v948
      %950 = vrot.lane.b32.xlu0 %v949, 96
      %v951 = vpop.permute.xlu0 %950
      %v953 = vunpack.c.l.b16 %v853
      %v954 = vpack.c.b16 %v953, %v953
      %955 = vrot.lane.b32.xlu0 %v954, 112
      %v956 = vpop.permute.xlu0 %955
      %v958 = vunpack.c.l.b16 %v912
      %v959 = vpack.c.b16 %v958, %v958
      %960 = vrot.lane.b32.xlu0 %v959, 16
      %v961 = vpop.permute.xlu0 %960
      %v963 = vunpack.c.l.b16 %v886
      %v964 = vpack.c.b16 %v963, %v963
      %965 = vrot.lane.b32.xlu0 %v964, 32
      %v966 = vpop.permute.xlu0 %965
      %v968 = vunpack.c.l.b16 %v920
      %v969 = vpack.c.b16 %v968, %v968
      %970 = vrot.lane.b32.xlu0 %v969, 48
      %v971 = vpop.permute.xlu0 %970
      %v973 = vunpack.c.l.b16 %v885
      %v974 = vpack.c.b16 %v973, %v973
      %975 = vrot.lane.b32.xlu0 %v974, 64
      %v976 = vpop.permute.xlu0 %975
      %v978 = vunpack.c.l.b16 %v919
      %v979 = vpack.c.b16 %v978, %v978
      %980 = vrot.lane.b32.xlu0 %v979, 80
      %v981 = vpop.permute.xlu0 %980
      %v983 = vunpack.c.l.b16 %v887
      %v984 = vpack.c.b16 %v983, %v983
      %985 = vrot.lane.b32.xlu0 %v984, 96
      %v986 = vpop.permute.xlu0 %985
      %v988 = vunpack.c.l.b16 %v921
      %v989 = vpack.c.b16 %v988, %v988
      %990 = vrot.lane.b32.xlu0 %v989, 112
      %v991 = vpop.permute.xlu0 %990
      %v994 = vsel %vm425, %v810, %v926
      %v996 = vsel %vm429, %v994, %v931
      %v998 = vsel %vm432, %v996, %v936
      %v1000 = vsel %vm435, %v998, %v941
      %v1002 = vsel %vm438, %v1000, %v946
      %v1004 = vsel %vm441, %v1002, %v951
      %v1006 = vsel %vm444, %v1004, %v956
      %v1009 = vsel %vm425, %v878, %v961
      %v1011 = vsel %vm429, %v1009, %v966
      %v1013 = vsel %vm432, %v1011, %v971
      %v1015 = vsel %vm435, %v1013, %v976
      %v1017 = vsel %vm438, %v1015, %v981
      %v1019 = vsel %vm441, %v1017, %v986
      %v1021 = vsel %vm444, %v1019, %v991
      %vm1022 = vsmask.f32 3328
      %vm1023 = vsmask.f32 7440
      %vm1024 = vmor %vm1022, %vm1023
      %v1026 = vrot.slane %v198, 4
      %v1027 = vshll.u32 %v183, 16
      %v1029 = vrot.slane %v1027, 5
      %v1030 = vor.u32 %v1026, %v1029
      %v1031 = vrot.slane %v1030, 4
      %v1032 = vshll.u32 %v184, 16
      %v1034 = vrot.slane %v1032, 5
      %v1035 = vsel %vm1024, %v1031, %v1034
      %v1037 = vrot.slane %v210, 4
      %v1038 = vor.u32 %v1037, %v1034
      %v1039 = vrot.slane %v1038, 4
      %v1041 = vshll.u32 %v185, 16
      %v1043 = vrot.slane %v1041, 5
      %v1044 = vsel %vm1024, %v1039, %v1043
      %v1046 = vrot.slane %v199, 4
      %v1047 = vshll.u32 %v186, 16
      %v1049 = vrot.slane %v1047, 5
      %v1050 = vor.u32 %v1046, %v1049
      %v1051 = vrot.slane %v1050, 4
      %v1052 = vshll.u32 %v187, 16
      %v1054 = vrot.slane %v1052, 5
      %v1055 = vsel %vm1024, %v1051, %v1054
      %v1057 = vrot.slane %v211, 4
      %v1058 = vor.u32 %v1057, %v1054
      %v1059 = vrot.slane %v1058, 4
      %v1061 = vshll.u32 %v188, 16
      %v1063 = vrot.slane %v1061, 5
      %v1064 = vsel %vm1024, %v1059, %v1063
      %v1066 = vrot.slane %v204, 4
      %v1067 = vshll.u32 %v189, 16
      %v1069 = vrot.slane %v1067, 5
      %v1070 = vor.u32 %v1066, %v1069
      %v1071 = vrot.slane %v1070, 4
      %v1072 = vshll.u32 %v190, 16
      %v1074 = vrot.slane %v1072, 5
      %v1075 = vsel %vm1024, %v1071, %v1074
      %v1077 = vrot.slane %v216, 4
      %v1078 = vor.u32 %v1077, %v1074
      %v1079 = vrot.slane %v1078, 4
      %v1081 = vshll.u32 %v191, 16
      %v1083 = vrot.slane %v1081, 5
      %v1084 = vsel %vm1024, %v1079, %v1083
      %v1086 = vrot.slane %v205, 4
      %v1087 = vshll.u32 %v192, 16
      %v1089 = vrot.slane %v1087, 5
      %v1090 = vor.u32 %v1086, %v1089
      %v1091 = vrot.slane %v1090, 4
      %v1092 = vshll.u32 %v193, 16
      %v1094 = vrot.slane %v1092, 5
      %v1095 = vsel %vm1024, %v1091, %v1094
      %v1097 = vrot.slane %v217, 4
      %v1098 = vor.u32 %v1097, %v1094
      %v1099 = vrot.slane %v1098, 4
      %v1101 = vshll.u32 %v194, 16
      %v1103 = vrot.slane %v1101, 5
      %v1104 = vsel %vm1024, %v1099, %v1103
      %v1107 = vpack.i.b16 %v1055, %v1035
      %v1108 = vshrl.u32 %v1035, 16
      %v1109 = vshrl.u32 %v1055, 16
      %v1110 = vpack.i.b16 %v1109, %v1108
      %v1113 = vpack.i.b16 %v1095, %v1075
      %v1114 = vshrl.u32 %v1075, 16
      %v1115 = vshrl.u32 %v1095, 16
      %v1116 = vpack.i.b16 %v1115, %v1114
      %v1119 = vpack.i.b16 %v1064, %v1044
      %v1120 = vshrl.u32 %v1044, 16
      %v1121 = vshrl.u32 %v1064, 16
      %v1122 = vpack.i.b16 %v1121, %v1120
      %v1125 = vpack.i.b16 %v1104, %v1084
      %v1126 = vshrl.u32 %v1084, 16
      %v1127 = vshrl.u32 %v1104, 16
      %v1128 = vpack.i.b16 %v1127, %v1126
      %v1131 = vunpack.c.l.s4 1983009808
      %v1132 = vunpack.c.0.s8 %v1131
      %v1133 = vlaneseq
      %v1134 = vshrl.u32 %v1133, 7
      %v1135 = vsub.s32 %v1132, %v1134
      %v1136 = vrot.slane %v1107, %v1135
      %v1139 = vunpack.c.l.s4 1983009808
      %v1140 = vunpack.c.0.s8 %v1139
      %v1141 = vlaneseq
      %v1142 = vshrl.u32 %v1141, 7
      %v1143 = vsub.s32 %v1140, %v1142
      %v1144 = vrot.slane %v1113, %v1143
      %v1145 = vcombine.low %v1136, %v1144
      %v1146 = vcombine.high %v1136, %v1144
      %v1148 = vunpack.c.l.s4 1934713408
      %v1149 = vunpack.c.0.s8 %v1148
      %v1150 = vlaneseq
      %v1151 = vshrl.u32 %v1150, 7
      %v1152 = vsub.s32 %v1149, %v1151
      %v1153 = vrot.slane %v1145, %v1152
      %v1155 = vunpack.c.l.s4 1934713408
      %v1156 = vunpack.c.0.s8 %v1155
      %v1157 = vlaneseq
      %v1158 = vshrl.u32 %v1157, 7
      %v1159 = vsub.s32 %v1156, %v1158
      %v1160 = vrot.slane %v1146, %v1159
      %v1161 = vcombine.high %v1153, 0
      %v1162 = vcombine.high %v1160, 0
      %v1165 = vunpack.c.l.s4 1983009808
      %v1166 = vunpack.c.0.s8 %v1165
      %v1167 = vlaneseq
      %v1168 = vshrl.u32 %v1167, 7
      %v1169 = vsub.s32 %v1166, %v1168
      %v1170 = vrot.slane %v1110, %v1169
      %v1173 = vunpack.c.l.s4 1983009808
      %v1174 = vunpack.c.0.s8 %v1173
      %v1175 = vlaneseq
      %v1176 = vshrl.u32 %v1175, 7
      %v1177 = vsub.s32 %v1174, %v1176
      %v1178 = vrot.slane %v1116, %v1177
      %v1179 = vcombine.low %v1170, %v1178
      %v1180 = vcombine.high %v1170, %v1178
      %v1182 = vunpack.c.l.s4 1934713408
      %v1183 = vunpack.c.0.s8 %v1182
      %v1184 = vlaneseq
      %v1185 = vshrl.u32 %v1184, 7
      %v1186 = vsub.s32 %v1183, %v1185
      %v1187 = vrot.slane %v1179, %v1186
      %v1189 = vunpack.c.l.s4 1934713408
      %v1190 = vunpack.c.0.s8 %v1189
      %v1191 = vlaneseq
      %v1192 = vshrl.u32 %v1191, 7
      %v1193 = vsub.s32 %v1190, %v1192
      %v1194 = vrot.slane %v1180, %v1193
      %v1195 = vcombine.high %v1187, 0
      %v1196 = vcombine.high %v1194, 0
      %v1199 = vunpack.c.l.s4 1983009808
      %v1200 = vunpack.c.0.s8 %v1199
      %v1201 = vlaneseq
      %v1202 = vshrl.u32 %v1201, 7
      %v1203 = vsub.s32 %v1200, %v1202
      %v1204 = vrot.slane %v1119, %v1203
      %v1207 = vunpack.c.l.s4 1983009808
      %v1208 = vunpack.c.0.s8 %v1207
      %v1209 = vlaneseq
      %v1210 = vshrl.u32 %v1209, 7
      %v1211 = vsub.s32 %v1208, %v1210
      %v1212 = vrot.slane %v1125, %v1211
      %v1213 = vcombine.low %v1204, %v1212
      %v1214 = vcombine.high %v1204, %v1212
      %v1216 = vunpack.c.l.s4 1934713408
      %v1217 = vunpack.c.0.s8 %v1216
      %v1218 = vlaneseq
      %v1219 = vshrl.u32 %v1218, 7
      %v1220 = vsub.s32 %v1217, %v1219
      %v1221 = vrot.slane %v1213, %v1220
      %v1223 = vunpack.c.l.s4 1934713408
      %v1224 = vunpack.c.0.s8 %v1223
      %v1225 = vlaneseq
      %v1226 = vshrl.u32 %v1225, 7
      %v1227 = vsub.s32 %v1224, %v1226
      %v1228 = vrot.slane %v1214, %v1227
      %v1229 = vcombine.high %v1221, 0
      %v1230 = vcombine.high %v1228, 0
      %v1233 = vunpack.c.l.s4 1983009808
      %v1234 = vunpack.c.0.s8 %v1233
      %v1235 = vlaneseq
      %v1236 = vshrl.u32 %v1235, 7
      %v1237 = vsub.s32 %v1234, %v1236
      %v1238 = vrot.slane %v1122, %v1237
      %v1241 = vunpack.c.l.s4 1983009808
      %v1242 = vunpack.c.0.s8 %v1241
      %v1243 = vlaneseq
      %v1244 = vshrl.u32 %v1243, 7
      %v1245 = vsub.s32 %v1242, %v1244
      %v1246 = vrot.slane %v1128, %v1245
      %v1247 = vcombine.low %v1238, %v1246
      %v1248 = vcombine.high %v1238, %v1246
      %v1250 = vunpack.c.l.s4 1934713408
      %v1251 = vunpack.c.0.s8 %v1250
      %v1252 = vlaneseq
      %v1253 = vshrl.u32 %v1252, 7
      %v1254 = vsub.s32 %v1251, %v1253
      %v1255 = vrot.slane %v1247, %v1254
      %v1257 = vunpack.c.l.s4 1934713408
      %v1258 = vunpack.c.0.s8 %v1257
      %v1259 = vlaneseq
      %v1260 = vshrl.u32 %v1259, 7
      %v1261 = vsub.s32 %v1258, %v1260
      %v1262 = vrot.slane %v1248, %v1261
      %v1263 = vcombine.high %v1255, 0
      %v1264 = vcombine.high %v1262, 0
      %v1266 = vunpack.c.l.b16 %v1187
      %v1267 = vpack.c.b16 %v1266, %v1266
      %1268 = vrot.lane.b32.xlu0 %v1267, 16
      %v1269 = vpop.permute.xlu0 %1268
      %v1271 = vunpack.c.l.b16 %v1161
      %v1272 = vpack.c.b16 %v1271, %v1271
      %1273 = vrot.lane.b32.xlu0 %v1272, 32
      %v1274 = vpop.permute.xlu0 %1273
      %v1276 = vunpack.c.l.b16 %v1195
      %v1277 = vpack.c.b16 %v1276, %v1276
      %1278 = vrot.lane.b32.xlu0 %v1277, 48
      %v1279 = vpop.permute.xlu0 %1278
      %v1281 = vunpack.c.l.b16 %v1160
      %v1282 = vpack.c.b16 %v1281, %v1281
      %1283 = vrot.lane.b32.xlu0 %v1282, 64
      %v1284 = vpop.permute.xlu0 %1283
      %v1286 = vunpack.c.l.b16 %v1194
      %v1287 = vpack.c.b16 %v1286, %v1286
      %1288 = vrot.lane.b32.xlu0 %v1287, 80
      %v1289 = vpop.permute.xlu0 %1288
      %v1291 = vunpack.c.l.b16 %v1162
      %v1292 = vpack.c.b16 %v1291, %v1291
      %1293 = vrot.lane.b32.xlu0 %v1292, 96
      %v1294 = vpop.permute.xlu0 %1293
      %v1296 = vunpack.c.l.b16 %v1196
      %v1297 = vpack.c.b16 %v1296, %v1296
      %1298 = vrot.lane.b32.xlu0 %v1297, 112
      %v1299 = vpop.permute.xlu0 %1298
      %v1301 = vunpack.c.l.b16 %v1255
      %v1302 = vpack.c.b16 %v1301, %v1301
      %1303 = vrot.lane.b32.xlu0 %v1302, 16
      %v1304 = vpop.permute.xlu0 %1303
      %v1306 = vunpack.c.l.b16 %v1229
      %v1307 = vpack.c.b16 %v1306, %v1306
      %1308 = vrot.lane.b32.xlu0 %v1307, 32
      %v1309 = vpop.permute.xlu0 %1308
      %v1311 = vunpack.c.l.b16 %v1263
      %v1312 = vpack.c.b16 %v1311, %v1311
      %1313 = vrot.lane.b32.xlu0 %v1312, 48
      %v1314 = vpop.permute.xlu0 %1313
      %v1316 = vunpack.c.l.b16 %v1228
      %v1317 = vpack.c.b16 %v1316, %v1316
      %1318 = vrot.lane.b32.xlu0 %v1317, 64
      %v1319 = vpop.permute.xlu0 %1318
      %v1321 = vunpack.c.l.b16 %v1262
      %v1322 = vpack.c.b16 %v1321, %v1321
      %1323 = vrot.lane.b32.xlu0 %v1322, 80
      %v1324 = vpop.permute.xlu0 %1323
      %v1326 = vunpack.c.l.b16 %v1230
      %v1327 = vpack.c.b16 %v1326, %v1326
      %1328 = vrot.lane.b32.xlu0 %v1327, 96
      %v1329 = vpop.permute.xlu0 %1328
      %v1331 = vunpack.c.l.b16 %v1264
      %v1332 = vpack.c.b16 %v1331, %v1331
      %1333 = vrot.lane.b32.xlu0 %v1332, 112
      %v1334 = vpop.permute.xlu0 %1333
      %v1337 = vsel %vm425, %v1153, %v1269
      %v1339 = vsel %vm429, %v1337, %v1274
      %v1341 = vsel %vm432, %v1339, %v1279
      %v1343 = vsel %vm435, %v1341, %v1284
      %v1345 = vsel %vm438, %v1343, %v1289
      %v1347 = vsel %vm441, %v1345, %v1294
      %v1349 = vsel %vm444, %v1347, %v1299
      %v1352 = vsel %vm425, %v1221, %v1304
      %v1354 = vsel %vm429, %v1352, %v1309
      %v1356 = vsel %vm432, %v1354, %v1314
      %v1358 = vsel %vm435, %v1356, %v1319
      %v1360 = vsel %vm438, %v1358, %v1324
      %v1362 = vsel %vm441, %v1360, %v1329
      %v1364 = vsel %vm444, %v1362, %v1334
      %1365 = vrot.lane.b32.xlu0 %v1035, 127
      %v1366 = vpop.permute.xlu0 %1365
      %1367 = vrot.lane.b32.xlu0 %v1044, 127
      %v1368 = vpop.permute.xlu0 %1367
      %1369 = vrot.lane.b32.xlu0 %v1055, 127
      %v1370 = vpop.permute.xlu0 %1369
      %1371 = vrot.lane.b32.xlu0 %v1064, 127
      %v1372 = vpop.permute.xlu0 %1371
      %1373 = vrot.lane.b32.xlu0 %v1075, 127
      %v1374 = vpop.permute.xlu0 %1373
      %1375 = vrot.lane.b32.xlu0 %v1084, 127
      %v1376 = vpop.permute.xlu0 %1375
      %1377 = vrot.lane.b32.xlu0 %v1095, 127
      %v1378 = vpop.permute.xlu0 %1377
      %1379 = vrot.lane.b32.xlu0 %v1104, 127
      %v1380 = vpop.permute.xlu0 %1379
      %v1383 = vpack.i.b16 %v1370, %v1366
      %v1384 = vshrl.u32 %v1366, 16
      %v1385 = vshrl.u32 %v1370, 16
      %v1386 = vpack.i.b16 %v1385, %v1384
      %v1389 = vpack.i.b16 %v1378, %v1374
      %v1390 = vshrl.u32 %v1374, 16
      %v1391 = vshrl.u32 %v1378, 16
      %v1392 = vpack.i.b16 %v1391, %v1390
      %v1395 = vpack.i.b16 %v1372, %v1368
      %v1396 = vshrl.u32 %v1368, 16
      %v1397 = vshrl.u32 %v1372, 16
      %v1398 = vpack.i.b16 %v1397, %v1396
      %v1401 = vpack.i.b16 %v1380, %v1376
      %v1402 = vshrl.u32 %v1376, 16
      %v1403 = vshrl.u32 %v1380, 16
      %v1404 = vpack.i.b16 %v1403, %v1402
      %v1407 = vunpack.c.l.s4 1983009808
      %v1408 = vunpack.c.0.s8 %v1407
      %v1409 = vlaneseq
      %v1410 = vshrl.u32 %v1409, 7
      %v1411 = vsub.s32 %v1408, %v1410
      %v1412 = vrot.slane %v1383, %v1411
      %v1415 = vunpack.c.l.s4 1983009808
      %v1416 = vunpack.c.0.s8 %v1415
      %v1417 = vlaneseq
      %v1418 = vshrl.u32 %v1417, 7
      %v1419 = vsub.s32 %v1416, %v1418
      %v1420 = vrot.slane %v1389, %v1419
      %v1421 = vcombine.low %v1412, %v1420
      %v1422 = vcombine.high %v1412, %v1420
      %v1424 = vunpack.c.l.s4 1934713408
      %v1425 = vunpack.c.0.s8 %v1424
      %v1426 = vlaneseq
      %v1427 = vshrl.u32 %v1426, 7
      %v1428 = vsub.s32 %v1425, %v1427
      %v1429 = vrot.slane %v1421, %v1428
      %v1431 = vunpack.c.l.s4 1934713408
      %v1432 = vunpack.c.0.s8 %v1431
      %v1433 = vlaneseq
      %v1434 = vshrl.u32 %v1433, 7
      %v1435 = vsub.s32 %v1432, %v1434
      %v1436 = vrot.slane %v1422, %v1435
      %v1437 = vcombine.high %v1429, 0
      %v1438 = vcombine.high %v1436, 0
      %v1441 = vunpack.c.l.s4 1983009808
      %v1442 = vunpack.c.0.s8 %v1441
      %v1443 = vlaneseq
      %v1444 = vshrl.u32 %v1443, 7
      %v1445 = vsub.s32 %v1442, %v1444
      %v1446 = vrot.slane %v1386, %v1445
      %v1449 = vunpack.c.l.s4 1983009808
      %v1450 = vunpack.c.0.s8 %v1449
      %v1451 = vlaneseq
      %v1452 = vshrl.u32 %v1451, 7
      %v1453 = vsub.s32 %v1450, %v1452
      %v1454 = vrot.slane %v1392, %v1453
      %v1455 = vcombine.low %v1446, %v1454
      %v1456 = vcombine.high %v1446, %v1454
      %v1458 = vunpack.c.l.s4 1934713408
      %v1459 = vunpack.c.0.s8 %v1458
      %v1460 = vlaneseq
      %v1461 = vshrl.u32 %v1460, 7
      %v1462 = vsub.s32 %v1459, %v1461
      %v1463 = vrot.slane %v1455, %v1462
      %v1465 = vunpack.c.l.s4 1934713408
      %v1466 = vunpack.c.0.s8 %v1465
      %v1467 = vlaneseq
      %v1468 = vshrl.u32 %v1467, 7
      %v1469 = vsub.s32 %v1466, %v1468
      %v1470 = vrot.slane %v1456, %v1469
      %v1471 = vcombine.high %v1463, 0
      %v1472 = vcombine.high %v1470, 0
      %v1475 = vunpack.c.l.s4 1983009808
      %v1476 = vunpack.c.0.s8 %v1475
      %v1477 = vlaneseq
      %v1478 = vshrl.u32 %v1477, 7
      %v1479 = vsub.s32 %v1476, %v1478
      %v1480 = vrot.slane %v1395, %v1479
      %v1483 = vunpack.c.l.s4 1983009808
      %v1484 = vunpack.c.0.s8 %v1483
      %v1485 = vlaneseq
      %v1486 = vshrl.u32 %v1485, 7
      %v1487 = vsub.s32 %v1484, %v1486
      %v1488 = vrot.slane %v1401, %v1487
      %v1489 = vcombine.low %v1480, %v1488
      %v1490 = vcombine.high %v1480, %v1488
      %v1492 = vunpack.c.l.s4 1934713408
      %v1493 = vunpack.c.0.s8 %v1492
      %v1494 = vlaneseq
      %v1495 = vshrl.u32 %v1494, 7
      %v1496 = vsub.s32 %v1493, %v1495
      %v1497 = vrot.slane %v1489, %v1496
      %v1499 = vunpack.c.l.s4 1934713408
      %v1500 = vunpack.c.0.s8 %v1499
      %v1501 = vlaneseq
      %v1502 = vshrl.u32 %v1501, 7
      %v1503 = vsub.s32 %v1500, %v1502
      %v1504 = vrot.slane %v1490, %v1503
      %v1505 = vcombine.high %v1497, 0
      %v1506 = vcombine.high %v1504, 0
      %v1509 = vunpack.c.l.s4 1983009808
      %v1510 = vunpack.c.0.s8 %v1509
      %v1511 = vlaneseq
      %v1512 = vshrl.u32 %v1511, 7
      %v1513 = vsub.s32 %v1510, %v1512
      %v1514 = vrot.slane %v1398, %v1513
      %v1517 = vunpack.c.l.s4 1983009808
      %v1518 = vunpack.c.0.s8 %v1517
      %v1519 = vlaneseq
      %v1520 = vshrl.u32 %v1519, 7
      %v1521 = vsub.s32 %v1518, %v1520
      %v1522 = vrot.slane %v1404, %v1521
      %v1523 = vcombine.low %v1514, %v1522
      %v1524 = vcombine.high %v1514, %v1522
      %v1526 = vunpack.c.l.s4 1934713408
      %v1527 = vunpack.c.0.s8 %v1526
      %v1528 = vlaneseq
      %v1529 = vshrl.u32 %v1528, 7
      %v1530 = vsub.s32 %v1527, %v1529
      %v1531 = vrot.slane %v1523, %v1530
      %v1533 = vunpack.c.l.s4 1934713408
      %v1534 = vunpack.c.0.s8 %v1533
      %v1535 = vlaneseq
      %v1536 = vshrl.u32 %v1535, 7
      %v1537 = vsub.s32 %v1534, %v1536
      %v1538 = vrot.slane %v1524, %v1537
      %v1539 = vcombine.high %v1531, 0
      %v1540 = vcombine.high %v1538, 0
      %v1542 = vunpack.c.l.b16 %v1463
      %v1543 = vpack.c.b16 %v1542, %v1542
      %1544 = vrot.lane.b32.xlu0 %v1543, 16
      %v1545 = vpop.permute.xlu0 %1544
      %v1547 = vunpack.c.l.b16 %v1437
      %v1548 = vpack.c.b16 %v1547, %v1547
      %1549 = vrot.lane.b32.xlu0 %v1548, 32
      %v1550 = vpop.permute.xlu0 %1549
      %v1552 = vunpack.c.l.b16 %v1471
      %v1553 = vpack.c.b16 %v1552, %v1552
      %1554 = vrot.lane.b32.xlu0 %v1553, 48
      %v1555 = vpop.permute.xlu0 %1554
      %v1557 = vunpack.c.l.b16 %v1436
      %v1558 = vpack.c.b16 %v1557, %v1557
      %1559 = vrot.lane.b32.xlu0 %v1558, 64
      %v1560 = vpop.permute.xlu0 %1559
      %v1562 = vunpack.c.l.b16 %v1470
      %v1563 = vpack.c.b16 %v1562, %v1562
      %1564 = vrot.lane.b32.xlu0 %v1563, 80
      %v1565 = vpop.permute.xlu0 %1564
      %v1567 = vunpack.c.l.b16 %v1438
      %v1568 = vpack.c.b16 %v1567, %v1567
      %1569 = vrot.lane.b32.xlu0 %v1568, 96
      %v1570 = vpop.permute.xlu0 %1569
      %v1572 = vunpack.c.l.b16 %v1472
      %v1573 = vpack.c.b16 %v1572, %v1572
      %1574 = vrot.lane.b32.xlu0 %v1573, 112
      %v1575 = vpop.permute.xlu0 %1574
      %v1577 = vunpack.c.l.b16 %v1531
      %v1578 = vpack.c.b16 %v1577, %v1577
      %1579 = vrot.lane.b32.xlu0 %v1578, 16
      %v1580 = vpop.permute.xlu0 %1579
      %v1582 = vunpack.c.l.b16 %v1505
      %v1583 = vpack.c.b16 %v1582, %v1582
      %1584 = vrot.lane.b32.xlu0 %v1583, 32
      %v1585 = vpop.permute.xlu0 %1584
      %v1587 = vunpack.c.l.b16 %v1539
      %v1588 = vpack.c.b16 %v1587, %v1587
      %1589 = vrot.lane.b32.xlu0 %v1588, 48
      %v1590 = vpop.permute.xlu0 %1589
      %v1592 = vunpack.c.l.b16 %v1504
      %v1593 = vpack.c.b16 %v1592, %v1592
      %1594 = vrot.lane.b32.xlu0 %v1593, 64
      %v1595 = vpop.permute.xlu0 %1594
      %v1597 = vunpack.c.l.b16 %v1538
      %v1598 = vpack.c.b16 %v1597, %v1597
      %1599 = vrot.lane.b32.xlu0 %v1598, 80
      %v1600 = vpop.permute.xlu0 %1599
      %v1602 = vunpack.c.l.b16 %v1506
      %v1603 = vpack.c.b16 %v1602, %v1602
      %1604 = vrot.lane.b32.xlu0 %v1603, 96
      %v1605 = vpop.permute.xlu0 %1604
      %v1607 = vunpack.c.l.b16 %v1540
      %v1608 = vpack.c.b16 %v1607, %v1607
      %1609 = vrot.lane.b32.xlu0 %v1608, 112
      %v1610 = vpop.permute.xlu0 %1609
      %v1613 = vsel %vm425, %v1429, %v1545
      %v1615 = vsel %vm429, %v1613, %v1550
      %v1617 = vsel %vm432, %v1615, %v1555
      %v1619 = vsel %vm435, %v1617, %v1560
      %v1621 = vsel %vm438, %v1619, %v1565
      %v1623 = vsel %vm441, %v1621, %v1570
      %v1625 = vsel %vm444, %v1623, %v1575
      %v1628 = vsel %vm425, %v1497, %v1580
      %v1630 = vsel %vm429, %v1628, %v1585
      %v1632 = vsel %vm432, %v1630, %v1590
      %v1634 = vsel %vm435, %v1632, %v1595
      %v1636 = vsel %vm438, %v1634, %v1600
      %v1638 = vsel %vm441, %v1636, %v1605
      %v1640 = vsel %vm444, %v1638, %v1610
      %1641 = vrot.lane.b32.xlu0 %v1035, 126
      %v1642 = vpop.permute.xlu0 %1641
      %1643 = vrot.lane.b32.xlu0 %v1044, 126
      %v1644 = vpop.permute.xlu0 %1643
      %1645 = vrot.lane.b32.xlu0 %v1055, 126
      %v1646 = vpop.permute.xlu0 %1645
      %1647 = vrot.lane.b32.xlu0 %v1064, 126
      %v1648 = vpop.permute.xlu0 %1647
      %1649 = vrot.lane.b32.xlu0 %v1075, 126
      %v1650 = vpop.permute.xlu0 %1649
      %1651 = vrot.lane.b32.xlu0 %v1084, 126
      %v1652 = vpop.permute.xlu0 %1651
      %1653 = vrot.lane.b32.xlu0 %v1095, 126
      %v1654 = vpop.permute.xlu0 %1653
      %1655 = vrot.lane.b32.xlu0 %v1104, 126
      %v1656 = vpop.permute.xlu0 %1655
      %v1659 = vpack.i.b16 %v1646, %v1642
      %v1660 = vshrl.u32 %v1642, 16
      %v1661 = vshrl.u32 %v1646, 16
      %v1662 = vpack.i.b16 %v1661, %v1660
      %v1665 = vpack.i.b16 %v1654, %v1650
      %v1666 = vshrl.u32 %v1650, 16
      %v1667 = vshrl.u32 %v1654, 16
      %v1668 = vpack.i.b16 %v1667, %v1666
      %v1671 = vpack.i.b16 %v1648, %v1644
      %v1672 = vshrl.u32 %v1644, 16
      %v1673 = vshrl.u32 %v1648, 16
      %v1674 = vpack.i.b16 %v1673, %v1672
      %v1677 = vpack.i.b16 %v1656, %v1652
      %v1678 = vshrl.u32 %v1652, 16
      %v1679 = vshrl.u32 %v1656, 16
      %v1680 = vpack.i.b16 %v1679, %v1678
      %v1683 = vunpack.c.l.s4 1983009808
      %v1684 = vunpack.c.0.s8 %v1683
      %v1685 = vlaneseq
      %v1686 = vshrl.u32 %v1685, 7
      %v1687 = vsub.s32 %v1684, %v1686
      %v1688 = vrot.slane %v1659, %v1687
      %v1691 = vunpack.c.l.s4 1983009808
      %v1692 = vunpack.c.0.s8 %v1691
      %v1693 = vlaneseq
      %v1694 = vshrl.u32 %v1693, 7
      %v1695 = vsub.s32 %v1692, %v1694
      %v1696 = vrot.slane %v1665, %v1695
      %v1697 = vcombine.low %v1688, %v1696
      %v1698 = vcombine.high %v1688, %v1696
      %v1700 = vunpack.c.l.s4 1934713408
      %v1701 = vunpack.c.0.s8 %v1700
      %v1702 = vlaneseq
      %v1703 = vshrl.u32 %v1702, 7
      %v1704 = vsub.s32 %v1701, %v1703
      %v1705 = vrot.slane %v1697, %v1704
      %v1707 = vunpack.c.l.s4 1934713408
      %v1708 = vunpack.c.0.s8 %v1707
      %v1709 = vlaneseq
      %v1710 = vshrl.u32 %v1709, 7
      %v1711 = vsub.s32 %v1708, %v1710
      %v1712 = vrot.slane %v1698, %v1711
      %v1713 = vcombine.high %v1705, 0
      %v1714 = vcombine.high %v1712, 0
      %v1717 = vunpack.c.l.s4 1983009808
      %v1718 = vunpack.c.0.s8 %v1717
      %v1719 = vlaneseq
      %v1720 = vshrl.u32 %v1719, 7
      %v1721 = vsub.s32 %v1718, %v1720
      %v1722 = vrot.slane %v1662, %v1721
      %v1725 = vunpack.c.l.s4 1983009808
      %v1726 = vunpack.c.0.s8 %v1725
      %v1727 = vlaneseq
      %v1728 = vshrl.u32 %v1727, 7
      %v1729 = vsub.s32 %v1726, %v1728
      %v1730 = vrot.slane %v1668, %v1729
      %v1731 = vcombine.low %v1722, %v1730
      %v1732 = vcombine.high %v1722, %v1730
      %v1734 = vunpack.c.l.s4 1934713408
      %v1735 = vunpack.c.0.s8 %v1734
      %v1736 = vlaneseq
      %v1737 = vshrl.u32 %v1736, 7
      %v1738 = vsub.s32 %v1735, %v1737
      %v1739 = vrot.slane %v1731, %v1738
      %v1741 = vunpack.c.l.s4 1934713408
      %v1742 = vunpack.c.0.s8 %v1741
      %v1743 = vlaneseq
      %v1744 = vshrl.u32 %v1743, 7
      %v1745 = vsub.s32 %v1742, %v1744
      %v1746 = vrot.slane %v1732, %v1745
      %v1747 = vcombine.high %v1739, 0
      %v1748 = vcombine.high %v1746, 0
      %v1751 = vunpack.c.l.s4 1983009808
      %v1752 = vunpack.c.0.s8 %v1751
      %v1753 = vlaneseq
      %v1754 = vshrl.u32 %v1753, 7
      %v1755 = vsub.s32 %v1752, %v1754
      %v1756 = vrot.slane %v1671, %v1755
      %v1759 = vunpack.c.l.s4 1983009808
      %v1760 = vunpack.c.0.s8 %v1759
      %v1761 = vlaneseq
      %v1762 = vshrl.u32 %v1761, 7
      %v1763 = vsub.s32 %v1760, %v1762
      %v1764 = vrot.slane %v1677, %v1763
      %v1765 = vcombine.low %v1756, %v1764
      %v1766 = vcombine.high %v1756, %v1764
      %v1768 = vunpack.c.l.s4 1934713408
      %v1769 = vunpack.c.0.s8 %v1768
      %v1770 = vlaneseq
      %v1771 = vshrl.u32 %v1770, 7
      %v1772 = vsub.s32 %v1769, %v1771
      %v1773 = vrot.slane %v1765, %v1772
      %v1775 = vunpack.c.l.s4 1934713408
      %v1776 = vunpack.c.0.s8 %v1775
      %v1777 = vlaneseq
      %v1778 = vshrl.u32 %v1777, 7
      %v1779 = vsub.s32 %v1776, %v1778
      %v1780 = vrot.slane %v1766, %v1779
      %v1781 = vcombine.high %v1773, 0
      %v1782 = vcombine.high %v1780, 0
      %v1785 = vunpack.c.l.s4 1983009808
      %v1786 = vunpack.c.0.s8 %v1785
      %v1787 = vlaneseq
      %v1788 = vshrl.u32 %v1787, 7
      %v1789 = vsub.s32 %v1786, %v1788
      %v1790 = vrot.slane %v1674, %v1789
      %v1793 = vunpack.c.l.s4 1983009808
      %v1794 = vunpack.c.0.s8 %v1793
      %v1795 = vlaneseq
      %v1796 = vshrl.u32 %v1795, 7
      %v1797 = vsub.s32 %v1794, %v1796
      %v1798 = vrot.slane %v1680, %v1797
      %v1799 = vcombine.low %v1790, %v1798
      %v1800 = vcombine.high %v1790, %v1798
      %v1802 = vunpack.c.l.s4 1934713408
      %v1803 = vunpack.c.0.s8 %v1802
      %v1804 = vlaneseq
      %v1805 = vshrl.u32 %v1804, 7
      %v1806 = vsub.s32 %v1803, %v1805
      %v1807 = vrot.slane %v1799, %v1806
      %v1809 = vunpack.c.l.s4 1934713408
      %v1810 = vunpack.c.0.s8 %v1809
      %v1811 = vlaneseq
      %v1812 = vshrl.u32 %v1811, 7
      %v1813 = vsub.s32 %v1810, %v1812
      %v1814 = vrot.slane %v1800, %v1813
      %v1815 = vcombine.high %v1807, 0
      %v1816 = vcombine.high %v1814, 0
      %v1818 = vunpack.c.l.b16 %v1739
      %v1819 = vpack.c.b16 %v1818, %v1818
      %1820 = vrot.lane.b32.xlu0 %v1819, 16
      %v1821 = vpop.permute.xlu0 %1820
      %v1823 = vunpack.c.l.b16 %v1713
      %v1824 = vpack.c.b16 %v1823, %v1823
      %1825 = vrot.lane.b32.xlu0 %v1824, 32
      %v1826 = vpop.permute.xlu0 %1825
      %v1828 = vunpack.c.l.b16 %v1747
      %v1829 = vpack.c.b16 %v1828, %v1828
      %1830 = vrot.lane.b32.xlu0 %v1829, 48
      %v1831 = vpop.permute.xlu0 %1830
      %v1833 = vunpack.c.l.b16 %v1712
      %v1834 = vpack.c.b16 %v1833, %v1833
      %1835 = vrot.lane.b32.xlu0 %v1834, 64
      %v1836 = vpop.permute.xlu0 %1835
      %v1838 = vunpack.c.l.b16 %v1746
      %v1839 = vpack.c.b16 %v1838, %v1838
      %1840 = vrot.lane.b32.xlu0 %v1839, 80
      %v1841 = vpop.permute.xlu0 %1840
      %v1843 = vunpack.c.l.b16 %v1714
      %v1844 = vpack.c.b16 %v1843, %v1843
      %1845 = vrot.lane.b32.xlu0 %v1844, 96
      %v1846 = vpop.permute.xlu0 %1845
      %v1848 = vunpack.c.l.b16 %v1748
      %v1849 = vpack.c.b16 %v1848, %v1848
      %1850 = vrot.lane.b32.xlu0 %v1849, 112
      %v1851 = vpop.permute.xlu0 %1850
      %v1853 = vunpack.c.l.b16 %v1807
      %v1854 = vpack.c.b16 %v1853, %v1853
      %1855 = vrot.lane.b32.xlu0 %v1854, 16
      %v1856 = vpop.permute.xlu0 %1855
      %v1858 = vunpack.c.l.b16 %v1781
      %v1859 = vpack.c.b16 %v1858, %v1858
      %1860 = vrot.lane.b32.xlu0 %v1859, 32
      %v1861 = vpop.permute.xlu0 %1860
      %v1863 = vunpack.c.l.b16 %v1815
      %v1864 = vpack.c.b16 %v1863, %v1863
      %1865 = vrot.lane.b32.xlu0 %v1864, 48
      %v1866 = vpop.permute.xlu0 %1865
      %v1868 = vunpack.c.l.b16 %v1780
      %v1869 = vpack.c.b16 %v1868, %v1868
      %1870 = vrot.lane.b32.xlu0 %v1869, 64
      %v1871 = vpop.permute.xlu0 %1870
      %v1873 = vunpack.c.l.b16 %v1814
      %v1874 = vpack.c.b16 %v1873, %v1873
      %1875 = vrot.lane.b32.xlu0 %v1874, 80
      %v1876 = vpop.permute.xlu0 %1875
      %v1878 = vunpack.c.l.b16 %v1782
      %v1879 = vpack.c.b16 %v1878, %v1878
      %1880 = vrot.lane.b32.xlu0 %v1879, 96
      %v1881 = vpop.permute.xlu0 %1880
      %v1883 = vunpack.c.l.b16 %v1816
      %v1884 = vpack.c.b16 %v1883, %v1883
      %1885 = vrot.lane.b32.xlu0 %v1884, 112
      %v1886 = vpop.permute.xlu0 %1885
      %v1889 = vsel %vm425, %v1705, %v1821
      %v1891 = vsel %vm429, %v1889, %v1826
      %v1893 = vsel %vm432, %v1891, %v1831
      %v1895 = vsel %vm435, %v1893, %v1836
      %v1897 = vsel %vm438, %v1895, %v1841
      %v1899 = vsel %vm441, %v1897, %v1846
      %v1901 = vsel %vm444, %v1899, %v1851
      %v1904 = vsel %vm425, %v1773, %v1856
      %v1906 = vsel %vm429, %v1904, %v1861
      %v1908 = vsel %vm432, %v1906, %v1866
      %v1910 = vsel %vm435, %v1908, %v1871
      %v1912 = vsel %vm438, %v1910, %v1876
      %v1914 = vsel %vm441, %v1912, %v1881
      %v1916 = vsel %vm444, %v1914, %v1886
      %vm1921 = vcmask 1042432
      %vm1922 = vcmask 1046532
      %vm1923 = vmor %vm1921, %vm1922
      %v1924 = vrot.slane %v183, 5
      %v1925 = vrot.slane %v1924, 4
      %v1926 = vrot.slane %v184, 5
      %v1927 = vsel %vm1923, %v1925, %v1926
      %v1928 = vrot.slane %v1926, 4
      %v1929 = vrot.slane %v185, 5
      %v1930 = vsel %vm1923, %v1928, %v1929
      %v1931 = vrot.slane %v186, 5
      %v1932 = vrot.slane %v1931, 4
      %v1933 = vrot.slane %v187, 5
      %v1934 = vsel %vm1923, %v1932, %v1933
      %v1935 = vrot.slane %v1933, 4
      %v1936 = vrot.slane %v188, 5
      %v1937 = vsel %vm1923, %v1935, %v1936
      %v1938 = vrot.slane %v189, 5
      %v1939 = vrot.slane %v1938, 4
      %v1940 = vrot.slane %v190, 5
      %v1941 = vsel %vm1923, %v1939, %v1940
      %v1942 = vrot.slane %v1940, 4
      %v1943 = vrot.slane %v191, 5
      %v1944 = vsel %vm1923, %v1942, %v1943
      %v1945 = vrot.slane %v192, 5
      %v1946 = vrot.slane %v1945, 4
      %v1947 = vrot.slane %v193, 5
      %v1948 = vsel %vm1923, %v1946, %v1947
      %v1949 = vrot.slane %v1947, 4
      %v1950 = vrot.slane %v194, 5
      %v1951 = vsel %vm1923, %v1949, %v1950
      %v1954 = vpack.i.b16 %v1934, %v1927
      %v1955 = vshrl.u32 %v1927, 16
      %v1956 = vshrl.u32 %v1934, 16
      %v1957 = vpack.i.b16 %v1956, %v1955
      %v1960 = vpack.i.b16 %v1948, %v1941
      %v1961 = vshrl.u32 %v1941, 16
      %v1962 = vshrl.u32 %v1948, 16
      %v1963 = vpack.i.b16 %v1962, %v1961
      %v1966 = vpack.i.b16 %v1937, %v1930
      %v1967 = vshrl.u32 %v1930, 16
      %v1968 = vshrl.u32 %v1937, 16
      %v1969 = vpack.i.b16 %v1968, %v1967
      %v1972 = vpack.i.b16 %v1951, %v1944
      %v1973 = vshrl.u32 %v1944, 16
      %v1974 = vshrl.u32 %v1951, 16
      %v1975 = vpack.i.b16 %v1974, %v1973
      %v1978 = vunpack.c.l.s4 1983009808
      %v1979 = vunpack.c.0.s8 %v1978
      %v1980 = vlaneseq
      %v1981 = vshrl.u32 %v1980, 7
      %v1982 = vsub.s32 %v1979, %v1981
      %v1983 = vrot.slane %v1954, %v1982
      %v1986 = vunpack.c.l.s4 1983009808
      %v1987 = vunpack.c.0.s8 %v1986
      %v1988 = vlaneseq
      %v1989 = vshrl.u32 %v1988, 7
      %v1990 = vsub.s32 %v1987, %v1989
      %v1991 = vrot.slane %v1960, %v1990
      %v1992 = vcombine.low %v1983, %v1991
      %v1993 = vcombine.high %v1983, %v1991
      %v1995 = vunpack.c.l.s4 1934713408
      %v1996 = vunpack.c.0.s8 %v1995
      %v1997 = vlaneseq
      %v1998 = vshrl.u32 %v1997, 7
      %v1999 = vsub.s32 %v1996, %v1998
      %v2000 = vrot.slane %v1992, %v1999
      %v2002 = vunpack.c.l.s4 1934713408
      %v2003 = vunpack.c.0.s8 %v2002
      %v2004 = vlaneseq
      %v2005 = vshrl.u32 %v2004, 7
      %v2006 = vsub.s32 %v2003, %v2005
      %v2007 = vrot.slane %v1993, %v2006
      %v2008 = vcombine.high %v2000, 0
      %v2009 = vcombine.high %v2007, 0
      %v2012 = vunpack.c.l.s4 1983009808
      %v2013 = vunpack.c.0.s8 %v2012
      %v2014 = vlaneseq
      %v2015 = vshrl.u32 %v2014, 7
      %v2016 = vsub.s32 %v2013, %v2015
      %v2017 = vrot.slane %v1957, %v2016
      %v2020 = vunpack.c.l.s4 1983009808
      %v2021 = vunpack.c.0.s8 %v2020
      %v2022 = vlaneseq
      %v2023 = vshrl.u32 %v2022, 7
      %v2024 = vsub.s32 %v2021, %v2023
      %v2025 = vrot.slane %v1963, %v2024
      %v2026 = vcombine.low %v2017, %v2025
      %v2027 = vcombine.high %v2017, %v2025
      %v2029 = vunpack.c.l.s4 1934713408
      %v2030 = vunpack.c.0.s8 %v2029
      %v2031 = vlaneseq
      %v2032 = vshrl.u32 %v2031, 7
      %v2033 = vsub.s32 %v2030, %v2032
      %v2034 = vrot.slane %v2026, %v2033
      %v2036 = vunpack.c.l.s4 1934713408
      %v2037 = vunpack.c.0.s8 %v2036
      %v2038 = vlaneseq
      %v2039 = vshrl.u32 %v2038, 7
      %v2040 = vsub.s32 %v2037, %v2039
      %v2041 = vrot.slane %v2027, %v2040
      %v2042 = vcombine.high %v2034, 0
      %v2043 = vcombine.high %v2041, 0
      %v2046 = vunpack.c.l.s4 1983009808
      %v2047 = vunpack.c.0.s8 %v2046
      %v2048 = vlaneseq
      %v2049 = vshrl.u32 %v2048, 7
      %v2050 = vsub.s32 %v2047, %v2049
      %v2051 = vrot.slane %v1966, %v2050
      %v2054 = vunpack.c.l.s4 1983009808
      %v2055 = vunpack.c.0.s8 %v2054
      %v2056 = vlaneseq
      %v2057 = vshrl.u32 %v2056, 7
      %v2058 = vsub.s32 %v2055, %v2057
      %v2059 = vrot.slane %v1972, %v2058
      %v2060 = vcombine.low %v2051, %v2059
      %v2061 = vcombine.high %v2051, %v2059
      %v2063 = vunpack.c.l.s4 1934713408
      %v2064 = vunpack.c.0.s8 %v2063
      %v2065 = vlaneseq
      %v2066 = vshrl.u32 %v2065, 7
      %v2067 = vsub.s32 %v2064, %v2066
      %v2068 = vrot.slane %v2060, %v2067
      %v2070 = vunpack.c.l.s4 1934713408
      %v2071 = vunpack.c.0.s8 %v2070
      %v2072 = vlaneseq
      %v2073 = vshrl.u32 %v2072, 7
      %v2074 = vsub.s32 %v2071, %v2073
      %v2075 = vrot.slane %v2061, %v2074
      %v2076 = vcombine.high %v2068, 0
      %v2077 = vcombine.high %v2075, 0
      %v2080 = vunpack.c.l.s4 1983009808
      %v2081 = vunpack.c.0.s8 %v2080
      %v2082 = vlaneseq
      %v2083 = vshrl.u32 %v2082, 7
      %v2084 = vsub.s32 %v2081, %v2083
      %v2085 = vrot.slane %v1969, %v2084
      %v2088 = vunpack.c.l.s4 1983009808
      %v2089 = vunpack.c.0.s8 %v2088
      %v2090 = vlaneseq
      %v2091 = vshrl.u32 %v2090, 7
      %v2092 = vsub.s32 %v2089, %v2091
      %v2093 = vrot.slane %v1975, %v2092
      %v2094 = vcombine.low %v2085, %v2093
      %v2095 = vcombine.high %v2085, %v2093
      %v2097 = vunpack.c.l.s4 1934713408
      %v2098 = vunpack.c.0.s8 %v2097
      %v2099 = vlaneseq
      %v2100 = vshrl.u32 %v2099, 7
      %v2101 = vsub.s32 %v2098, %v2100
      %v2102 = vrot.slane %v2094, %v2101
      %v2104 = vunpack.c.l.s4 1934713408
      %v2105 = vunpack.c.0.s8 %v2104
      %v2106 = vlaneseq
      %v2107 = vshrl.u32 %v2106, 7
      %v2108 = vsub.s32 %v2105, %v2107
      %v2109 = vrot.slane %v2095, %v2108
      %v2110 = vcombine.high %v2102, 0
      %v2111 = vcombine.high %v2109, 0
      %v2113 = vunpack.c.l.b16 %v2034
      %v2114 = vpack.c.b16 %v2113, %v2113
      %2115 = vrot.lane.b32.xlu0 %v2114, 16
      %v2116 = vpop.permute.xlu0 %2115
      %v2118 = vunpack.c.l.b16 %v2008
      %v2119 = vpack.c.b16 %v2118, %v2118
      %2120 = vrot.lane.b32.xlu0 %v2119, 32
      %v2121 = vpop.permute.xlu0 %2120
      %v2123 = vunpack.c.l.b16 %v2042
      %v2124 = vpack.c.b16 %v2123, %v2123
      %2125 = vrot.lane.b32.xlu0 %v2124, 48
      %v2126 = vpop.permute.xlu0 %2125
      %v2128 = vunpack.c.l.b16 %v2007
      %v2129 = vpack.c.b16 %v2128, %v2128
      %2130 = vrot.lane.b32.xlu0 %v2129, 64
      %v2131 = vpop.permute.xlu0 %2130
      %v2133 = vunpack.c.l.b16 %v2041
      %v2134 = vpack.c.b16 %v2133, %v2133
      %2135 = vrot.lane.b32.xlu0 %v2134, 80
      %v2136 = vpop.permute.xlu0 %2135
      %v2138 = vunpack.c.l.b16 %v2009
      %v2139 = vpack.c.b16 %v2138, %v2138
      %2140 = vrot.lane.b32.xlu0 %v2139, 96
      %v2141 = vpop.permute.xlu0 %2140
      %v2143 = vunpack.c.l.b16 %v2043
      %v2144 = vpack.c.b16 %v2143, %v2143
      %2145 = vrot.lane.b32.xlu0 %v2144, 112
      %v2146 = vpop.permute.xlu0 %2145
      %v2148 = vunpack.c.l.b16 %v2102
      %v2149 = vpack.c.b16 %v2148, %v2148
      %2150 = vrot.lane.b32.xlu0 %v2149, 16
      %v2151 = vpop.permute.xlu0 %2150
      %v2153 = vunpack.c.l.b16 %v2076
      %v2154 = vpack.c.b16 %v2153, %v2153
      %2155 = vrot.lane.b32.xlu0 %v2154, 32
      %v2156 = vpop.permute.xlu0 %2155
      %v2158 = vunpack.c.l.b16 %v2110
      %v2159 = vpack.c.b16 %v2158, %v2158
      %2160 = vrot.lane.b32.xlu0 %v2159, 48
      %v2161 = vpop.permute.xlu0 %2160
      %v2163 = vunpack.c.l.b16 %v2075
      %v2164 = vpack.c.b16 %v2163, %v2163
      %2165 = vrot.lane.b32.xlu0 %v2164, 64
      %v2166 = vpop.permute.xlu0 %2165
      %v2168 = vunpack.c.l.b16 %v2109
      %v2169 = vpack.c.b16 %v2168, %v2168
      %2170 = vrot.lane.b32.xlu0 %v2169, 80
      %v2171 = vpop.permute.xlu0 %2170
      %v2173 = vunpack.c.l.b16 %v2077
      %v2174 = vpack.c.b16 %v2173, %v2173
      %2175 = vrot.lane.b32.xlu0 %v2174, 96
      %v2176 = vpop.permute.xlu0 %2175
      %v2178 = vunpack.c.l.b16 %v2111
      %v2179 = vpack.c.b16 %v2178, %v2178
      %2180 = vrot.lane.b32.xlu0 %v2179, 112
      %v2181 = vpop.permute.xlu0 %2180
      %v2184 = vsel %vm425, %v2000, %v2116
      %v2186 = vsel %vm429, %v2184, %v2121
      %v2188 = vsel %vm432, %v2186, %v2126
      %v2190 = vsel %vm435, %v2188, %v2131
      %v2192 = vsel %vm438, %v2190, %v2136
      %v2194 = vsel %vm441, %v2192, %v2141
      %v2196 = vsel %vm444, %v2194, %v2146
      %v2199 = vsel %vm425, %v2068, %v2151
      %v2201 = vsel %vm429, %v2199, %v2156
      %v2203 = vsel %vm432, %v2201, %v2161
      %v2205 = vsel %vm435, %v2203, %v2166
      %v2207 = vsel %vm438, %v2205, %v2171
      %v2209 = vsel %vm441, %v2207, %v2176
      %v2211 = vsel %vm444, %v2209, %v2181
      %2212 = vrot.lane.b32.xlu0 %v1927, 127
      %v2213 = vpop.permute.xlu0 %2212
      %2214 = vrot.lane.b32.xlu0 %v1930, 127
      %v2215 = vpop.permute.xlu0 %2214
      %2216 = vrot.lane.b32.xlu0 %v1934, 127
      %v2217 = vpop.permute.xlu0 %2216
      %2218 = vrot.lane.b32.xlu0 %v1937, 127
      %v2219 = vpop.permute.xlu0 %2218
      %2220 = vrot.lane.b32.xlu0 %v1941, 127
      %v2221 = vpop.permute.xlu0 %2220
      %2222 = vrot.lane.b32.xlu0 %v1944, 127
      %v2223 = vpop.permute.xlu0 %2222
      %2224 = vrot.lane.b32.xlu0 %v1948, 127
      %v2225 = vpop.permute.xlu0 %2224
      %2226 = vrot.lane.b32.xlu0 %v1951, 127
      %v2227 = vpop.permute.xlu0 %2226
      %v2230 = vpack.i.b16 %v2217, %v2213
      %v2231 = vshrl.u32 %v2213, 16
      %v2232 = vshrl.u32 %v2217, 16
      %v2233 = vpack.i.b16 %v2232, %v2231
      %v2236 = vpack.i.b16 %v2225, %v2221
      %v2237 = vshrl.u32 %v2221, 16
      %v2238 = vshrl.u32 %v2225, 16
      %v2239 = vpack.i.b16 %v2238, %v2237
      %v2242 = vpack.i.b16 %v2219, %v2215
      %v2243 = vshrl.u32 %v2215, 16
      %v2244 = vshrl.u32 %v2219, 16
      %v2245 = vpack.i.b16 %v2244, %v2243
      %v2248 = vpack.i.b16 %v2227, %v2223
      %v2249 = vshrl.u32 %v2223, 16
      %v2250 = vshrl.u32 %v2227, 16
      %v2251 = vpack.i.b16 %v2250, %v2249
      %v2254 = vunpack.c.l.s4 1983009808
      %v2255 = vunpack.c.0.s8 %v2254
      %v2256 = vlaneseq
      %v2257 = vshrl.u32 %v2256, 7
      %v2258 = vsub.s32 %v2255, %v2257
      %v2259 = vrot.slane %v2230, %v2258
      %v2262 = vunpack.c.l.s4 1983009808
      %v2263 = vunpack.c.0.s8 %v2262
      %v2264 = vlaneseq
      %v2265 = vshrl.u32 %v2264, 7
      %v2266 = vsub.s32 %v2263, %v2265
      %v2267 = vrot.slane %v2236, %v2266
      %v2268 = vcombine.low %v2259, %v2267
      %v2269 = vcombine.high %v2259, %v2267
      %v2271 = vunpack.c.l.s4 1934713408
      %v2272 = vunpack.c.0.s8 %v2271
      %v2273 = vlaneseq
      %v2274 = vshrl.u32 %v2273, 7
      %v2275 = vsub.s32 %v2272, %v2274
      %v2276 = vrot.slane %v2268, %v2275
      %v2278 = vunpack.c.l.s4 1934713408
      %v2279 = vunpack.c.0.s8 %v2278
      %v2280 = vlaneseq
      %v2281 = vshrl.u32 %v2280, 7
      %v2282 = vsub.s32 %v2279, %v2281
      %v2283 = vrot.slane %v2269, %v2282
      %v2284 = vcombine.high %v2276, 0
      %v2285 = vcombine.high %v2283, 0
      %v2288 = vunpack.c.l.s4 1983009808
      %v2289 = vunpack.c.0.s8 %v2288
      %v2290 = vlaneseq
      %v2291 = vshrl.u32 %v2290, 7
      %v2292 = vsub.s32 %v2289, %v2291
      %v2293 = vrot.slane %v2233, %v2292
      %v2296 = vunpack.c.l.s4 1983009808
      %v2297 = vunpack.c.0.s8 %v2296
      %v2298 = vlaneseq
      %v2299 = vshrl.u32 %v2298, 7
      %v2300 = vsub.s32 %v2297, %v2299
      %v2301 = vrot.slane %v2239, %v2300
      %v2302 = vcombine.low %v2293, %v2301
      %v2303 = vcombine.high %v2293, %v2301
      %v2305 = vunpack.c.l.s4 1934713408
      %v2306 = vunpack.c.0.s8 %v2305
      %v2307 = vlaneseq
      %v2308 = vshrl.u32 %v2307, 7
      %v2309 = vsub.s32 %v2306, %v2308
      %v2310 = vrot.slane %v2302, %v2309
      %v2312 = vunpack.c.l.s4 1934713408
      %v2313 = vunpack.c.0.s8 %v2312
      %v2314 = vlaneseq
      %v2315 = vshrl.u32 %v2314, 7
      %v2316 = vsub.s32 %v2313, %v2315
      %v2317 = vrot.slane %v2303, %v2316
      %v2318 = vcombine.high %v2310, 0
      %v2319 = vcombine.high %v2317, 0
      %v2322 = vunpack.c.l.s4 1983009808
      %v2323 = vunpack.c.0.s8 %v2322
      %v2324 = vlaneseq
      %v2325 = vshrl.u32 %v2324, 7
      %v2326 = vsub.s32 %v2323, %v2325
      %v2327 = vrot.slane %v2242, %v2326
      %v2330 = vunpack.c.l.s4 1983009808
      %v2331 = vunpack.c.0.s8 %v2330
      %v2332 = vlaneseq
      %v2333 = vshrl.u32 %v2332, 7
      %v2334 = vsub.s32 %v2331, %v2333
      %v2335 = vrot.slane %v2248, %v2334
      %v2336 = vcombine.low %v2327, %v2335
      %v2337 = vcombine.high %v2327, %v2335
      %v2339 = vunpack.c.l.s4 1934713408
      %v2340 = vunpack.c.0.s8 %v2339
      %v2341 = vlaneseq
      %v2342 = vshrl.u32 %v2341, 7
      %v2343 = vsub.s32 %v2340, %v2342
      %v2344 = vrot.slane %v2336, %v2343
      %v2346 = vunpack.c.l.s4 1934713408
      %v2347 = vunpack.c.0.s8 %v2346
      %v2348 = vlaneseq
      %v2349 = vshrl.u32 %v2348, 7
      %v2350 = vsub.s32 %v2347, %v2349
      %v2351 = vrot.slane %v2337, %v2350
      %v2352 = vcombine.high %v2344, 0
      %v2353 = vcombine.high %v2351, 0
      %v2356 = vunpack.c.l.s4 1983009808
      %v2357 = vunpack.c.0.s8 %v2356
      %v2358 = vlaneseq
      %v2359 = vshrl.u32 %v2358, 7
      %v2360 = vsub.s32 %v2357, %v2359
      %v2361 = vrot.slane %v2245, %v2360
      %v2364 = vunpack.c.l.s4 1983009808
      %v2365 = vunpack.c.0.s8 %v2364
      %v2366 = vlaneseq
      %v2367 = vshrl.u32 %v2366, 7
      %v2368 = vsub.s32 %v2365, %v2367
      %v2369 = vrot.slane %v2251, %v2368
      %v2370 = vcombine.low %v2361, %v2369
      %v2371 = vcombine.high %v2361, %v2369
      %v2373 = vunpack.c.l.s4 1934713408
      %v2374 = vunpack.c.0.s8 %v2373
      %v2375 = vlaneseq
      %v2376 = vshrl.u32 %v2375, 7
      %v2377 = vsub.s32 %v2374, %v2376
      %v2378 = vrot.slane %v2370, %v2377
      %v2380 = vunpack.c.l.s4 1934713408
      %v2381 = vunpack.c.0.s8 %v2380
      %v2382 = vlaneseq
      %v2383 = vshrl.u32 %v2382, 7
      %v2384 = vsub.s32 %v2381, %v2383
      %v2385 = vrot.slane %v2371, %v2384
      %v2386 = vcombine.high %v2378, 0
      %v2387 = vcombine.high %v2385, 0
      %v2389 = vunpack.c.l.b16 %v2310
      %v2390 = vpack.c.b16 %v2389, %v2389
      %2391 = vrot.lane.b32.xlu0 %v2390, 16
      %v2392 = vpop.permute.xlu0 %2391
      %v2394 = vunpack.c.l.b16 %v2284
      %v2395 = vpack.c.b16 %v2394, %v2394
      %2396 = vrot.lane.b32.xlu0 %v2395, 32
      %v2397 = vpop.permute.xlu0 %2396
      %v2399 = vunpack.c.l.b16 %v2318
      %v2400 = vpack.c.b16 %v2399, %v2399
      %2401 = vrot.lane.b32.xlu0 %v2400, 48
      %v2402 = vpop.permute.xlu0 %2401
      %v2404 = vunpack.c.l.b16 %v2283
      %v2405 = vpack.c.b16 %v2404, %v2404
      %2406 = vrot.lane.b32.xlu0 %v2405, 64
      %v2407 = vpop.permute.xlu0 %2406
      %v2409 = vunpack.c.l.b16 %v2317
      %v2410 = vpack.c.b16 %v2409, %v2409
      %2411 = vrot.lane.b32.xlu0 %v2410, 80
      %v2412 = vpop.permute.xlu0 %2411
      %v2414 = vunpack.c.l.b16 %v2285
      %v2415 = vpack.c.b16 %v2414, %v2414
      %2416 = vrot.lane.b32.xlu0 %v2415, 96
      %v2417 = vpop.permute.xlu0 %2416
      %v2419 = vunpack.c.l.b16 %v2319
      %v2420 = vpack.c.b16 %v2419, %v2419
      %2421 = vrot.lane.b32.xlu0 %v2420, 112
      %v2422 = vpop.permute.xlu0 %2421
      %v2424 = vunpack.c.l.b16 %v2378
      %v2425 = vpack.c.b16 %v2424, %v2424
      %2426 = vrot.lane.b32.xlu0 %v2425, 16
      %v2427 = vpop.permute.xlu0 %2426
      %v2429 = vunpack.c.l.b16 %v2352
      %v2430 = vpack.c.b16 %v2429, %v2429
      %2431 = vrot.lane.b32.xlu0 %v2430, 32
      %v2432 = vpop.permute.xlu0 %2431
      %v2434 = vunpack.c.l.b16 %v2386
      %v2435 = vpack.c.b16 %v2434, %v2434
      %2436 = vrot.lane.b32.xlu0 %v2435, 48
      %v2437 = vpop.permute.xlu0 %2436
      %v2439 = vunpack.c.l.b16 %v2351
      %v2440 = vpack.c.b16 %v2439, %v2439
      %2441 = vrot.lane.b32.xlu0 %v2440, 64
      %v2442 = vpop.permute.xlu0 %2441
      %v2444 = vunpack.c.l.b16 %v2385
      %v2445 = vpack.c.b16 %v2444, %v2444
      %2446 = vrot.lane.b32.xlu0 %v2445, 80
      %v2447 = vpop.permute.xlu0 %2446
      %v2449 = vunpack.c.l.b16 %v2353
      %v2450 = vpack.c.b16 %v2449, %v2449
      %2451 = vrot.lane.b32.xlu0 %v2450, 96
      %v2452 = vpop.permute.xlu0 %2451
      %v2454 = vunpack.c.l.b16 %v2387
      %v2455 = vpack.c.b16 %v2454, %v2454
      %2456 = vrot.lane.b32.xlu0 %v2455, 112
      %v2457 = vpop.permute.xlu0 %2456
      %v2460 = vsel %vm425, %v2276, %v2392
      %v2462 = vsel %vm429, %v2460, %v2397
      %v2464 = vsel %vm432, %v2462, %v2402
      %v2466 = vsel %vm435, %v2464, %v2407
      %v2468 = vsel %vm438, %v2466, %v2412
      %v2470 = vsel %vm441, %v2468, %v2417
      %v2472 = vsel %vm444, %v2470, %v2422
      %v2475 = vsel %vm425, %v2344, %v2427
      %v2477 = vsel %vm429, %v2475, %v2432
      %v2479 = vsel %vm432, %v2477, %v2437
      %v2481 = vsel %vm435, %v2479, %v2442
      %v2483 = vsel %vm438, %v2481, %v2447
      %v2485 = vsel %vm441, %v2483, %v2452
      %v2487 = vsel %vm444, %v2485, %v2457
      %2488 = vrot.lane.b32.xlu0 %v1927, 126
      %v2489 = vpop.permute.xlu0 %2488
      %2490 = vrot.lane.b32.xlu0 %v1930, 126
      %v2491 = vpop.permute.xlu0 %2490
      %2492 = vrot.lane.b32.xlu0 %v1934, 126
      %v2493 = vpop.permute.xlu0 %2492
      %2494 = vrot.lane.b32.xlu0 %v1937, 126
      %v2495 = vpop.permute.xlu0 %2494
      %2496 = vrot.lane.b32.xlu0 %v1941, 126
      %v2497 = vpop.permute.xlu0 %2496
      %2498 = vrot.lane.b32.xlu0 %v1944, 126
      %v2499 = vpop.permute.xlu0 %2498
      %2500 = vrot.lane.b32.xlu0 %v1948, 126
      %v2501 = vpop.permute.xlu0 %2500
      %2502 = vrot.lane.b32.xlu0 %v1951, 126
      %v2503 = vpop.permute.xlu0 %2502
      %v2506 = vpack.i.b16 %v2493, %v2489
      %v2507 = vshrl.u32 %v2489, 16
      %v2508 = vshrl.u32 %v2493, 16
      %v2509 = vpack.i.b16 %v2508, %v2507
      %v2512 = vpack.i.b16 %v2501, %v2497
      %v2513 = vshrl.u32 %v2497, 16
      %v2514 = vshrl.u32 %v2501, 16
      %v2515 = vpack.i.b16 %v2514, %v2513
      %v2518 = vpack.i.b16 %v2495, %v2491
      %v2519 = vshrl.u32 %v2491, 16
      %v2520 = vshrl.u32 %v2495, 16
      %v2521 = vpack.i.b16 %v2520, %v2519
      %v2524 = vpack.i.b16 %v2503, %v2499
      %v2525 = vshrl.u32 %v2499, 16
      %v2526 = vshrl.u32 %v2503, 16
      %v2527 = vpack.i.b16 %v2526, %v2525
      %v2530 = vunpack.c.l.s4 1983009808
      %v2531 = vunpack.c.0.s8 %v2530
      %v2532 = vlaneseq
      %v2533 = vshrl.u32 %v2532, 7
      %v2534 = vsub.s32 %v2531, %v2533
      %v2535 = vrot.slane %v2506, %v2534
      %v2538 = vunpack.c.l.s4 1983009808
      %v2539 = vunpack.c.0.s8 %v2538
      %v2540 = vlaneseq
      %v2541 = vshrl.u32 %v2540, 7
      %v2542 = vsub.s32 %v2539, %v2541
      %v2543 = vrot.slane %v2512, %v2542
      %v2544 = vcombine.low %v2535, %v2543
      %v2545 = vcombine.high %v2535, %v2543
      %v2547 = vunpack.c.l.s4 1934713408
      %v2548 = vunpack.c.0.s8 %v2547
      %v2549 = vlaneseq
      %v2550 = vshrl.u32 %v2549, 7
      %v2551 = vsub.s32 %v2548, %v2550
      %v2552 = vrot.slane %v2544, %v2551
      %v2554 = vunpack.c.l.s4 1934713408
      %v2555 = vunpack.c.0.s8 %v2554
      %v2556 = vlaneseq
      %v2557 = vshrl.u32 %v2556, 7
      %v2558 = vsub.s32 %v2555, %v2557
      %v2559 = vrot.slane %v2545, %v2558
      %v2560 = vcombine.high %v2552, 0
      %v2561 = vcombine.high %v2559, 0
      %v2564 = vunpack.c.l.s4 1983009808
      %v2565 = vunpack.c.0.s8 %v2564
      %v2566 = vlaneseq
      %v2567 = vshrl.u32 %v2566, 7
      %v2568 = vsub.s32 %v2565, %v2567
      %v2569 = vrot.slane %v2509, %v2568
      %v2572 = vunpack.c.l.s4 1983009808
      %v2573 = vunpack.c.0.s8 %v2572
      %v2574 = vlaneseq
      %v2575 = vshrl.u32 %v2574, 7
      %v2576 = vsub.s32 %v2573, %v2575
      %v2577 = vrot.slane %v2515, %v2576
      %v2578 = vcombine.low %v2569, %v2577
      %v2579 = vcombine.high %v2569, %v2577
      %v2581 = vunpack.c.l.s4 1934713408
      %v2582 = vunpack.c.0.s8 %v2581
      %v2583 = vlaneseq
      %v2584 = vshrl.u32 %v2583, 7
      %v2585 = vsub.s32 %v2582, %v2584
      %v2586 = vrot.slane %v2578, %v2585
      %v2588 = vunpack.c.l.s4 1934713408
      %v2589 = vunpack.c.0.s8 %v2588
      %v2590 = vlaneseq
      %v2591 = vshrl.u32 %v2590, 7
      %v2592 = vsub.s32 %v2589, %v2591
      %v2593 = vrot.slane %v2579, %v2592
      %v2594 = vcombine.high %v2586, 0
      %v2595 = vcombine.high %v2593, 0
      %v2598 = vunpack.c.l.s4 1983009808
      %v2599 = vunpack.c.0.s8 %v2598
      %v2600 = vlaneseq
      %v2601 = vshrl.u32 %v2600, 7
      %v2602 = vsub.s32 %v2599, %v2601
      %v2603 = vrot.slane %v2518, %v2602
      %v2606 = vunpack.c.l.s4 1983009808
      %v2607 = vunpack.c.0.s8 %v2606
      %v2608 = vlaneseq
      %v2609 = vshrl.u32 %v2608, 7
      %v2610 = vsub.s32 %v2607, %v2609
      %v2611 = vrot.slane %v2524, %v2610
      %v2612 = vcombine.low %v2603, %v2611
      %v2613 = vcombine.high %v2603, %v2611
      %v2615 = vunpack.c.l.s4 1934713408
      %v2616 = vunpack.c.0.s8 %v2615
      %v2617 = vlaneseq
      %v2618 = vshrl.u32 %v2617, 7
      %v2619 = vsub.s32 %v2616, %v2618
      %v2620 = vrot.slane %v2612, %v2619
      %v2622 = vunpack.c.l.s4 1934713408
      %v2623 = vunpack.c.0.s8 %v2622
      %v2624 = vlaneseq
      %v2625 = vshrl.u32 %v2624, 7
      %v2626 = vsub.s32 %v2623, %v2625
      %v2627 = vrot.slane %v2613, %v2626
      %v2628 = vcombine.high %v2620, 0
      %v2629 = vcombine.high %v2627, 0
      %v2632 = vunpack.c.l.s4 1983009808
      %v2633 = vunpack.c.0.s8 %v2632
      %v2634 = vlaneseq
      %v2635 = vshrl.u32 %v2634, 7
      %v2636 = vsub.s32 %v2633, %v2635
      %v2637 = vrot.slane %v2521, %v2636
      %v2640 = vunpack.c.l.s4 1983009808
      %v2641 = vunpack.c.0.s8 %v2640
      %v2642 = vlaneseq
      %v2643 = vshrl.u32 %v2642, 7
      %v2644 = vsub.s32 %v2641, %v2643
      %v2645 = vrot.slane %v2527, %v2644
      %v2646 = vcombine.low %v2637, %v2645
      %v2647 = vcombine.high %v2637, %v2645
      %v2649 = vunpack.c.l.s4 1934713408
      %v2650 = vunpack.c.0.s8 %v2649
      %v2651 = vlaneseq
      %v2652 = vshrl.u32 %v2651, 7
      %v2653 = vsub.s32 %v2650, %v2652
      %v2654 = vrot.slane %v2646, %v2653
      %v2656 = vunpack.c.l.s4 1934713408
      %v2657 = vunpack.c.0.s8 %v2656
      %v2658 = vlaneseq
      %v2659 = vshrl.u32 %v2658, 7
      %v2660 = vsub.s32 %v2657, %v2659
      %v2661 = vrot.slane %v2647, %v2660
      %v2662 = vcombine.high %v2654, 0
      %v2663 = vcombine.high %v2661, 0
      %v2665 = vunpack.c.l.b16 %v2586
      %v2666 = vpack.c.b16 %v2665, %v2665
      %2667 = vrot.lane.b32.xlu0 %v2666, 16
      %v2668 = vpop.permute.xlu0 %2667
      %v2670 = vunpack.c.l.b16 %v2560
      %v2671 = vpack.c.b16 %v2670, %v2670
      %2672 = vrot.lane.b32.xlu0 %v2671, 32
      %v2673 = vpop.permute.xlu0 %2672
      %v2675 = vunpack.c.l.b16 %v2594
      %v2676 = vpack.c.b16 %v2675, %v2675
      %2677 = vrot.lane.b32.xlu0 %v2676, 48
      %v2678 = vpop.permute.xlu0 %2677
      %v2680 = vunpack.c.l.b16 %v2559
      %v2681 = vpack.c.b16 %v2680, %v2680
      %2682 = vrot.lane.b32.xlu0 %v2681, 64
      %v2683 = vpop.permute.xlu0 %2682
      %v2685 = vunpack.c.l.b16 %v2593
      %v2686 = vpack.c.b16 %v2685, %v2685
      %2687 = vrot.lane.b32.xlu0 %v2686, 80
      %v2688 = vpop.permute.xlu0 %2687
      %v2690 = vunpack.c.l.b16 %v2561
      %v2691 = vpack.c.b16 %v2690, %v2690
      %2692 = vrot.lane.b32.xlu0 %v2691, 96
      %v2693 = vpop.permute.xlu0 %2692
      %v2695 = vunpack.c.l.b16 %v2595
      %v2696 = vpack.c.b16 %v2695, %v2695
      %2697 = vrot.lane.b32.xlu0 %v2696, 112
      %v2698 = vpop.permute.xlu0 %2697
      %v2700 = vunpack.c.l.b16 %v2654
      %v2701 = vpack.c.b16 %v2700, %v2700
      %2702 = vrot.lane.b32.xlu0 %v2701, 16
      %v2703 = vpop.permute.xlu0 %2702
      %v2705 = vunpack.c.l.b16 %v2628
      %v2706 = vpack.c.b16 %v2705, %v2705
      %2707 = vrot.lane.b32.xlu0 %v2706, 32
      %v2708 = vpop.permute.xlu0 %2707
      %v2710 = vunpack.c.l.b16 %v2662
      %v2711 = vpack.c.b16 %v2710, %v2710
      %2712 = vrot.lane.b32.xlu0 %v2711, 48
      %v2713 = vpop.permute.xlu0 %2712
      %v2715 = vunpack.c.l.b16 %v2627
      %v2716 = vpack.c.b16 %v2715, %v2715
      %2717 = vrot.lane.b32.xlu0 %v2716, 64
      %v2718 = vpop.permute.xlu0 %2717
      %v2720 = vunpack.c.l.b16 %v2661
      %v2721 = vpack.c.b16 %v2720, %v2720
      %2722 = vrot.lane.b32.xlu0 %v2721, 80
      %v2723 = vpop.permute.xlu0 %2722
      %v2725 = vunpack.c.l.b16 %v2629
      %v2726 = vpack.c.b16 %v2725, %v2725
      %2727 = vrot.lane.b32.xlu0 %v2726, 96
      %v2728 = vpop.permute.xlu0 %2727
      %v2730 = vunpack.c.l.b16 %v2663
      %v2731 = vpack.c.b16 %v2730, %v2730
      %2732 = vrot.lane.b32.xlu0 %v2731, 112
      %v2733 = vpop.permute.xlu0 %2732
      %v2736 = vsel %vm425, %v2552, %v2668
      %v2738 = vsel %vm429, %v2736, %v2673
      %v2740 = vsel %vm432, %v2738, %v2678
      %v2742 = vsel %vm435, %v2740, %v2683
      %v2744 = vsel %vm438, %v2742, %v2688
      %v2746 = vsel %vm441, %v2744, %v2693
      %v2748 = vsel %vm444, %v2746, %v2698
      %v2751 = vsel %vm425, %v2620, %v2703
      %v2753 = vsel %vm429, %v2751, %v2708
      %v2755 = vsel %vm432, %v2753, %v2713
      %v2757 = vsel %vm435, %v2755, %v2718
      %v2759 = vsel %vm438, %v2757, %v2723
      %v2761 = vsel %vm441, %v2759, %v2728
      %v2763 = vsel %vm444, %v2761, %v2733
      %v2766 = vrot.slane %v730, 6
      %v2767 = vrot.slane %v745, 6
      %v2770 = vrot.slane %v1006, 4
      %v2771 = vrot.slane %v1021, 4
      %v2774 = vrot.slane %v1349, 2
      %v2775 = vrot.slane %v1364, 2
      %v2778 = vrot.slane %v1901, 6
      %v2779 = vrot.slane %v1916, 6
      %v2782 = vrot.slane %v2196, 4
      %v2783 = vrot.slane %v2211, 4
      %v2786 = vrot.slane %v2472, 2
      %v2787 = vrot.slane %v2487, 2
      %vm2788 = vcmask 1041408
      %v2790 = vsel %vm2788, %v446, %v2766
      %v2792 = vsel %vm2788, %v461, %v2767
      %vm2793 = vcmask 1043456
      %v2795 = vsel %vm2793, %v2790, %v2770
      %v2797 = vsel %vm2793, %v2792, %v2771
      %vm2798 = vcmask 1045504
      %v2800 = vsel %vm2798, %v2795, %v2774
      %v2803 = vsel %vm2798, %v2797, %v2775
      %v2806 = vsel %vm2788, %v1625, %v2778
      %v2808 = vsel %vm2788, %v1640, %v2779
      %v2810 = vsel %vm2793, %v2806, %v2782
      %v2812 = vsel %vm2793, %v2808, %v2783
      %v2814 = vsel %vm2798, %v2810, %v2786
      %v2817 = vsel %vm2798, %v2812, %v2787
      %v2819 = vld [vmem:[%s1] sm:$0xf]
      %vm2820 = vcmask 293888
      %v2822 = vsel %vm2820, %v2819, 0
      %v2824 = vsel %vm2788, %v2748, 0
      %v2826 = vsel %vm2788, %v2763, 0
      %2828 = vmatprep.subr.bf16.mxu0 %v2803
      %2829 = vmatpush1.bf16.msra.mxu0 %v2800
      %2830 = vmatprep.subr.bf16.mxu0 %v2817
      %2831 = vmatpush1.bf16.msra.mxu0 %v2814
      %2832 = vmatprep.subr.bf16.mxu0 %v2826
      %2833 = vmatpush1.bf16.msra.mxu0 %v2824
      %2834 = vmatprep.subr.bf16.mxu0 0
      %2835 = vmatpush1.bf16.msra.mxu0 0
      %2836 = vmatprep.subr.bf16.mxu0 0
      %2837 = vmatpush1.bf16.msra.mxu0 0
      %2838 = vmatprep.subr.bf16.mxu0 0
      %2839 = vmatpush1.bf16.msra.mxu0 0
      %2840 = vmatprep.subr.bf16.mxu0 0
      %2841 = vmatpush1.bf16.msra.mxu0 0
      %2842 = vmatprep.subr.bf16.mxu0 0
      %2843 = vmatpush1.bf16.msra.mxu0 0
      %2844 = vmatprep.subr.bf16.mxu0 0
      %2845 = vmatpush1.bf16.msra.mxu0 0
      %2846 = vmatprep.subr.bf16.mxu0 0
      %2847 = vmatpush1.bf16.msra.mxu0 0
      %2848 = vmatprep.subr.bf16.mxu0 0
      %2849 = vmatpush1.bf16.msra.mxu0 0
      %2850 = vmatprep.subr.bf16.mxu0 0
      %2851 = vmatpush1.bf16.msra.mxu0 0
      %2852 = vmatprep.subr.bf16.mxu0 0
      %2853 = vmatpush1.bf16.msra.mxu0 0
      %2854 = vmatprep.subr.bf16.mxu0 0
      %2855 = vmatpush1.bf16.msra.mxu0 0
      %2856 = vmatprep.subr.bf16.mxu0 0
      %2857 = vmatpush1.bf16.msra.mxu0 0
      %2858 = vmatprep.subr.bf16.mxu0 0
      %2859 = vmatpush1.bf16.msra.mxu0 0
      %2860 = vmatprep.mubr.bf16.mxu0 0
      %2861 = vmatmul.mubr.bf16.gmra.mrb[0].mxu0 %v2822
      %v2862 = vpop.f32.mrb[0].mxu0
      %v2863 = vadd.f32 0.0, %v2862
      %v2864 = vpop.f32.mrb[0].mxu0
      %v2865 = vadd.f32 0.0, %v2864
      %v2866 = vpop.f32.mrb[0].mxu0
      %v2867 = vpop.f32.mrb[0].mxu0
      %2868 = vdwg.mxu0
      %2869 = vst [vmem:[%s177] sm:$0xff] %v2863
      %2870 = vst [vmem:[%s177 + $0x8] sm:$0xff] %v2865
      %v2871 = vadd.f32 %v2863, %v2865
      %2872 = vadd.xlane.f32.xlu0 %v2871
      %v2873 = vpop.xlane.xlu0 %2872
      %v2874 = vmul.f32 %v2863, %v2863
      %v2875 = vmul.f32 %v2865, %v2865
      %v2876 = vadd.f32 %v2874, %v2875
      %2877 = vadd.xlane.f32.xlu0 %v2876
      %v2878 = vpop.xlane.xlu0 %2877
      %vm2879 = vcmask 7168
      %v2880 = vsel %vm2879, %v2873, %v2878
      %vm2881 = vcmask 15360
      %2882 = vst.msk [vmem:[%s181] sm:$0xff] %vm2881, %v2880
      %p2883 = scmp.lt.s32.totalorder %s15, 1
      %s2884 = scalar_select %p2883, %s15, 1
      %s2885 = smul.addr %s2884, 2
      %s2886 = smul.addr %s2885, 8
      %s2887 = scalar_lea.vmem %s2, %s2886
      %p2888 = scmp.lt.s32.totalorder %s15, 1
      %s2889 = scalar_select %p2888, %s15, 1
      %s2890 = smul.addr %s2889, 8
      %s2891 = scalar_lea.vmem %s3, %s2890
      // Predicated region
      $region29: #{basic_conv2d1_forward.1} parent=27 // pred_check
        %p2892 = pneg %p80
      $region30: #{basic_conv2d1_forward.1} parent=27 // pred_check_branch
        %2894 = sbr.rel (%p2892) target = $region32
      $region31: #{basic_conv2d1_forward.1} parent=27 // pred_region
        _
      $region32: #{basic_conv2d1_forward.1} parent=27 // pred_fallthru
        _
      // Predicated region
      $region33: #{basic_conv2d1_forward.1} parent=27 // pred_check
        %p2895 = pneg %p106
      $region34: #{basic_conv2d1_forward.1} parent=27 // pred_check_branch
        %2897 = sbr.rel (%p2895) target = $region36
      $region35: #{basic_conv2d1_forward.1} parent=27 // pred_region
        _
      $region36: #{basic_conv2d1_forward.1} parent=27 // pred_fallthru
        _
    $region28: #{basic_conv2d1_forward.1} parent=5 // pred_fallthru
      _
    %p2898 = scmp.le.s32.totalorder 2, %s10
    // Predicated region
    $region37: #{basic_conv2d1_forward.1} parent=5 // pred_check
      %p2899 = pneg %p2898
    $region38: #{basic_conv2d1_forward.1} parent=5 // pred_check_branch
      %2901 = sbr.rel (%p2899) target = $region40
    $region39: #{basic_conv2d1_forward.1} parent=5 // pred_region
      %s2902 = ssub.s32 %s10, 2
      // Predicated region
      $region41: #{basic_conv2d1_forward.1} parent=39 // pred_check
        %p2903 = pneg %p86
      $region42: #{basic_conv2d1_forward.1} parent=39 // pred_check_branch
        %2905 = sbr.rel (%p2903) target = $region44
      $region43: #{basic_conv2d1_forward.1} parent=39 // pred_region
        %p2906 = scmp.lt.s32.totalorder %s16, 1
        %s2907 = scalar_select %p2906, %s16, 1
        %s2908 = smul.addr %s2907, 2
        %s2909 = smul.addr %s2908, 8
        %s2910 = scalar_lea.vmem %s2, %s2909
      $region44: #{basic_conv2d1_forward.1} parent=39 // pred_fallthru
        _
      // Predicated region
      $region45: #{basic_conv2d1_forward.1} parent=39 // pred_check
        %p2911 = pneg %p112
      $region46: #{basic_conv2d1_forward.1} parent=39 // pred_check_branch
        %2913 = sbr.rel (%p2911) target = $region48
      $region47: #{basic_conv2d1_forward.1} parent=39 // pred_region
        %p2914 = scmp.lt.s32.totalorder %s16, 1
        %s2915 = scalar_select %p2914, %s16, 1
        %s2916 = smul.addr %s2915, 8
        %s2917 = scalar_lea.vmem %s3, %s2916
      $region48: #{basic_conv2d1_forward.1} parent=39 // pred_fallthru
        _
    $region40: #{basic_conv2d1_forward.1} parent=5 // pred_fallthru
      _
  $region6: #{basic_conv2d1_forward.1} parent=0 // loop_footer
    %s14 = sadd.s32 1, %s10
  $region7: #{basic_conv2d1_forward.1} parent=0 // loop_footer_branch
    %9 = sbr.rel target = $region3
  $region8: #{basic_conv2d1_forward.1} parent=0 // loop_exit
    _

</llo_original>
